<compile_context>
chip_gen: v6e
topology: v6e:2x2x1
jax: 0.10.0
libtpu: 0.0.40
codegen_flags: <defaults>
</compile_context>

<pallas_src>
import jax
import jax.numpy as jnp
from jax.experimental import pallas as pl
from jax.experimental.pallas import tpu as pltpu

BN_EPS = 1e-5


def _elu(a):
    # ELU(alpha=1): x if x > 0 else exp(x) - 1 (clamp arg so the unselected
    # branch of the where cannot overflow).
    return jnp.where(a > 0, a, jnp.exp(jnp.minimum(a, 0.0)) - 1.0)


def _fused_block_kernel(x_ref, u_ref, b1_ref, b2_ref, bp_ref,
                        s1_ref, t1_ref, s2_ref, t2_ref, t3_ref, o_ref):
    """Whole pre-activation block for TS depth/batch slices, fully in VMEM.

    x_ref  : (R, W*Cin)      packed input rows, R = TS*H (row = one (s, h) line)
    u_ref  : (2, R, R)       0/1 row-selection matrices (up / down H shift with
                             replicate clamping), block-diagonal over TS slices
    b1_ref : (3, W*Cin, W*P) banded conv1 weights, one per H tap; W taps and
                             W replicate padding are folded in
    b2_ref : (3, W*P, W*P)   banded conv2 weights
    bp_ref : (W*Cin, W*P)    1x1x1 projector weights with BN3 scale folded in
    s1/t1  : (1, W*Cin)      packed BN1 scale / shift ; s2/t2 : (1, W*P) BN2
    t3     : (1, W*P)        packed BN3 shift (projector bias)
    o_ref  : (R, W*P)        packed output rows (lane-dense)
    """
    f32 = jnp.float32
    x = x_ref[...]
    u_up = u_ref[0]
    u_dn = u_ref[1]

    def conv(a, b_ref):
        # replicate-padded 1x3x3 conv = center rows + up-shifted rows +
        # down-shifted rows, each one fat matmul against a banded weight.
        out = jnp.dot(a, b_ref[1], preferred_element_type=f32)
        out = out + jnp.dot(jnp.dot(u_up, a, preferred_element_type=f32),
                            b_ref[0], preferred_element_type=f32)
        out = out + jnp.dot(jnp.dot(u_dn, a, preferred_element_type=f32),
                            b_ref[2], preferred_element_type=f32)
        return out

    a1 = _elu(x * s1_ref[...] + t1_ref[...])            # BN1 + ELU
    c1 = conv(a1, b1_ref)                               # conv1 (VMEM-resident)
    a2 = _elu(c1 * s2_ref[...] + t2_ref[...])           # BN2 + ELU
    c2 = conv(a2, b2_ref)                               # conv2
    proj = jnp.dot(x, bp_ref[...], preferred_element_type=f32)  # 1x1x1 + BN3 scale
    o_ref[...] = (c2 + proj + t3_ref[...]).astype(o_ref.dtype)  # + BN3 shift + residual


def _banded_conv_weights(w, W):
    """Torch conv weight (Cout, Cin, 1, 3, 3) -> (3, W*Cin, W*Cout) banded
    matrices (one per H tap di) applying the 1x3 W-direction conv, including
    replicate padding at the W edges, to a (.., W*Cin)-packed row."""
    taps = jnp.transpose(w[:, :, 0], (2, 3, 1, 0)).astype(jnp.float32)  # (3,3,Cin,Cout)
    Cin, Cout = taps.shape[2], taps.shape[3]
    cols = jnp.arange(W)
    sel = jnp.stack(
        [(cols[:, None] == jnp.clip(cols + dj - 1, 0, W - 1)[None, :]
          ).astype(jnp.float32) for dj in range(3)], axis=0)            # (3, W_in, W_out)
    bs = []
    for di in range(3):
        b = jnp.einsum("jab,jic->aibc", sel, taps[di])                  # (W,Cin,W,Cout)
        bs.append(b.reshape(W * Cin, W * Cout))
    return jnp.stack(bs, axis=0)


def _pick_ts(S, H, max_rows=512):
    """Slices per grid step: amortize per-step overhead but keep >=2 grid
    steps when possible (megacore) and a bounded block size."""
    divs = [d for d in range(1, S + 1) if S % d == 0 and d * H <= max_rows]
    if not divs:
        return 1
    multi = [d for d in divs if S // d >= 2]
    return max(multi) if multi else max(divs)


def basic_block_3d_pa_pallas(x, params):
    """x: (N, Cin, D, H, W) float32 -> (N, P, D, H, W) float32."""
    N, Cin, D, H, W = x.shape
    P = params["conv1_w"].shape[0]
    S = N * D
    TS = _pick_ts(S, H)
    R = TS * H
    WCin = W * Cin
    WP = W * P

    def affine(prefix):
        g, b = params[prefix + "_gamma"], params[prefix + "_beta"]
        m, v = params[prefix + "_mean"], params[prefix + "_var"]
        sc = g / jnp.sqrt(v + BN_EPS)
        sh = b - m * sc
        return sc.astype(jnp.float32), sh.astype(jnp.float32)

    s1, t1 = affine("bn1")
    s2, t2 = affine("bn2")
    s3, t3 = affine("bn3")

    # Conv weights as banded matrices (W taps + W replicate padding folded in).
    b1 = _banded_conv_weights(params["conv1_w"], W)        # (3, W*Cin, W*P)
    b2 = _banded_conv_weights(params["conv2_w"], W)        # (3, W*P,  W*P)
    # 1x1x1 projector with BN3 scale folded into the weight, BN3 shift as bias.
    wp = jnp.transpose(params["proj_w"][:, :, 0, 0, 0], (1, 0)) * s3[None, :]
    bp = jnp.kron(jnp.eye(W, dtype=jnp.float32), wp)       # (W*Cin, W*P)

    # Per-channel BN vectors packed along the w-major/c-minor lane layout.
    s1p = jnp.tile(s1, W)[None, :]
    t1p = jnp.tile(t1, W)[None, :]
    s2p = jnp.tile(s2, W)[None, :]
    t2p = jnp.tile(t2, W)[None, :]
    t3p = jnp.tile(t3, W)[None, :]

    # H-shift selection matrices with replicate clamping, block-diag per slice.
    h = jnp.arange(H)
    u_up = (h[None, :] == jnp.clip(h - 1, 0, H - 1)[:, None]).astype(jnp.float32)
    u_dn = (h[None, :] == jnp.clip(h + 1, 0, H - 1)[:, None]).astype(jnp.float32)
    eye_ts = jnp.eye(TS, dtype=jnp.float32)
    u = jnp.stack([jnp.kron(eye_ts, u_up), jnp.kron(eye_ts, u_dn)], axis=0)  # (2,R,R)

    # NCDHW -> packed rows (S*H, W*Cin); no wrapper-side padding needed.
    xs = jnp.transpose(x, (0, 2, 3, 4, 1)).reshape(S * H, WCin).astype(jnp.float32)

    out = pl.pallas_call(
        _fused_block_kernel,
        out_shape=jax.ShapeDtypeStruct((S * H, WP), jnp.float32),
        grid=(S // TS,),
        in_specs=[
            pl.BlockSpec((R, WCin), lambda i: (i, 0)),
            pl.BlockSpec((2, R, R), lambda i: (0, 0, 0)),
            pl.BlockSpec((3, WCin, WP), lambda i: (0, 0, 0)),
            pl.BlockSpec((3, WP, WP), lambda i: (0, 0, 0)),
            pl.BlockSpec((WCin, WP), lambda i: (0, 0)),
            pl.BlockSpec((1, WCin), lambda i: (0, 0)),
            pl.BlockSpec((1, WCin), lambda i: (0, 0)),
            pl.BlockSpec((1, WP), lambda i: (0, 0)),
            pl.BlockSpec((1, WP), lambda i: (0, 0)),
            pl.BlockSpec((1, WP), lambda i: (0, 0)),
        ],
        out_specs=pl.BlockSpec((R, WP), lambda i: (i, 0)),
        compiler_params=pltpu.CompilerParams(
            dimension_semantics=("parallel",),
            vmem_limit_bytes=32 * 1024 * 1024),
    )(xs, u, b1, b2, bp, s1p, t1p, s2p, t2p, t3p)

    y = out.reshape(N, D, H, W, P).transpose(0, 4, 1, 2, 3)    # back to NCDHW
    return y


# ----------------------- pure-JAX reference (for checking) -----------------------
def basic_block_3d_pa_reference(x, params):
    def bn(v, prefix):
        g, b = params[prefix + "_gamma"], params[prefix + "_beta"]
        m, var = params[prefix + "_mean"], params[prefix + "_var"]
        sc = g / jnp.sqrt(var + BN_EPS)
        sh = b - m * sc
        return v * sc[None, :, None, None, None] + sh[None, :, None, None, None]

    def conv133_replicate(v, w):
        vp = jnp.pad(v, ((0, 0), (0, 0), (0, 0), (1, 1), (1, 1)), mode="edge")
        return jax.lax.conv_general_dilated(
            vp, w, window_strides=(1, 1, 1), padding="VALID",
            dimension_numbers=("NCDHW", "OIDHW", "NCDHW"),
            precision=jax.lax.Precision.HIGHEST)

    a1 = _elu(bn(x, "bn1"))
    c1 = conv133_replicate(a1, params["conv1_w"])
    a2 = _elu(bn(c1, "bn2"))
    c2 = conv133_replicate(a2, params["conv2_w"])
    p = jax.lax.conv_general_dilated(
        x, params["proj_w"], window_strides=(1, 1, 1), padding="VALID",
        dimension_numbers=("NCDHW", "OIDHW", "NCDHW"),
        precision=jax.lax.Precision.HIGHEST)
    p = bn(p, "bn3")
    return c2 + p


def init_params(key, in_planes, planes):
    ks = jax.random.split(key, 15)
    p = {}
    p["conv1_w"] = 0.1 * jax.random.normal(ks[0], (planes, in_planes, 1, 3, 3), jnp.float32)
    p["conv2_w"] = 0.1 * jax.random.normal(ks[1], (planes, planes, 1, 3, 3), jnp.float32)
    p["proj_w"] = 0.1 * jax.random.normal(ks[2], (planes, in_planes, 1, 1, 1), jnp.float32)

    def bn_init(kg, kb, km, kv, c, prefix):
        p[prefix + "_gamma"] = jax.random.uniform(kg, (c,), jnp.float32, 0.8, 1.2)
        p[prefix + "_beta"] = 0.1 * jax.random.normal(kb, (c,), jnp.float32)
        p[prefix + "_mean"] = 0.1 * jax.random.normal(km, (c,), jnp.float32)
        p[prefix + "_var"] = jax.random.uniform(kv, (c,), jnp.float32, 0.5, 1.5)

    bn_init(ks[3], ks[4], ks[5], ks[6], in_planes, "bn1")
    bn_init(ks[7], ks[8], ks[9], ks[10], planes, "bn2")
    bn_init(ks[11], ks[12], ks[13], ks[14], planes, "bn3")
    return p


if __name__ == "__main__":
    N, Cin, D, H, W = 2, 4, 4, 16, 16
    P = 8  # planes != in_planes -> projector is active (conv1x1 + BN)

    key = jax.random.PRNGKey(0)
    kx, kp = jax.random.split(key)
    x = jax.random.normal(kx, (N, Cin, D, H, W), jnp.float32)
    params = init_params(kp, Cin, P)

    fwd = jax.jit(basic_block_3d_pa_pallas)
    y = jax.block_until_ready(fwd(x, params))

    y_ref = basic_block_3d_pa_reference(x, params)
    assert y.shape == (N, P, D, H, W), y.shape
    err = float(jnp.max(jnp.abs(y - y_ref)))
    assert jnp.allclose(y, y_ref, rtol=1e-3, atol=1e-3), err

    print("KERNEL_OK")
</pallas_src>

<mosaic_0001>
module attributes {stable_mosaic.version = 11 : i64} {
  func.func @_fused_block_kernel(%arg0: i32, %arg1: memref<64x64xf32, #tpu.memory_space<vmem>>, %arg2: memref<2x64x64xf32, #tpu.memory_space<vmem>>, %arg3: memref<3x64x128xf32, #tpu.memory_space<vmem>>, %arg4: memref<3x128x128xf32, #tpu.memory_space<vmem>>, %arg5: memref<64x128xf32, #tpu.memory_space<vmem>>, %arg6: memref<1x64xf32, #tpu.memory_space<vmem>>, %arg7: memref<1x64xf32, #tpu.memory_space<vmem>>, %arg8: memref<1x128xf32, #tpu.memory_space<vmem>>, %arg9: memref<1x128xf32, #tpu.memory_space<vmem>>, %arg10: memref<1x128xf32, #tpu.memory_space<vmem>>, %arg11: memref<64x128xf32, #tpu.memory_space<vmem>>) attributes {dimension_semantics = [#tpu.dimension_semantics<parallel>], iteration_bounds = array<i64: 2>, scalar_prefetch = 0 : i64, scratch_operands = 0 : i64, tpu.core_type = #tpu.core_type<tc>, window_params = [{transform_indices = @transform_0, window_bounds = array<i64: 64, 64>}, {pipeline_mode = #tpu.pipeline_mode<synchronous>, transform_indices = @transform_1, window_bounds = array<i64: 2, 64, 64>}, {pipeline_mode = #tpu.pipeline_mode<synchronous>, transform_indices = @transform_2, window_bounds = array<i64: 3, 64, 128>}, {pipeline_mode = #tpu.pipeline_mode<synchronous>, transform_indices = @transform_3, window_bounds = array<i64: 3, 128, 128>}, {pipeline_mode = #tpu.pipeline_mode<synchronous>, transform_indices = @transform_4, window_bounds = array<i64: 64, 128>}, {pipeline_mode = #tpu.pipeline_mode<synchronous>, transform_indices = @transform_5, window_bounds = array<i64: 1, 64>}, {pipeline_mode = #tpu.pipeline_mode<synchronous>, transform_indices = @transform_6, window_bounds = array<i64: 1, 64>}, {pipeline_mode = #tpu.pipeline_mode<synchronous>, transform_indices = @transform_7, window_bounds = array<i64: 1, 128>}, {pipeline_mode = #tpu.pipeline_mode<synchronous>, transform_indices = @transform_8, window_bounds = array<i64: 1, 128>}, {pipeline_mode = #tpu.pipeline_mode<synchronous>, transform_indices = @transform_9, window_bounds = array<i64: 1, 128>}, {transform_indices = @transform_10, window_bounds = array<i64: 64, 128>}]} {
    %c0 = arith.constant 0 : index
    %c0_0 = arith.constant 0 : index
    %0 = vector.load %arg1[%c0, %c0_0] : memref<64x64xf32, #tpu.memory_space<vmem>>, vector<64x64xf32>
    %c0_1 = arith.constant 0 : index
    %c0_2 = arith.constant 0 : index
    %c0_3 = arith.constant 0 : index
    %1 = vector.load %arg2[%c0_1, %c0_2, %c0_3] : memref<2x64x64xf32, #tpu.memory_space<vmem>>, vector<1x64x64xf32>
    %2 = vector.shape_cast %1 : vector<1x64x64xf32> to vector<64x64xf32>
    %c1 = arith.constant 1 : index
    %c0_4 = arith.constant 0 : index
    %c0_5 = arith.constant 0 : index
    %3 = vector.load %arg2[%c1, %c0_4, %c0_5] : memref<2x64x64xf32, #tpu.memory_space<vmem>>, vector<1x64x64xf32>
    %4 = vector.shape_cast %3 : vector<1x64x64xf32> to vector<64x64xf32>
    %c0_6 = arith.constant 0 : index
    %c0_7 = arith.constant 0 : index
    %5 = vector.load %arg6[%c0_6, %c0_7] : memref<1x64xf32, #tpu.memory_space<vmem>>, vector<1x64xf32>
    %6 = vector.broadcast %5 : vector<1x64xf32> to vector<64x64xf32>
    %7 = arith.mulf %0, %6 : vector<64x64xf32>
    %c0_8 = arith.constant 0 : index
    %c0_9 = arith.constant 0 : index
    %8 = vector.load %arg7[%c0_8, %c0_9] : memref<1x64xf32, #tpu.memory_space<vmem>>, vector<1x64xf32>
    %9 = vector.broadcast %8 : vector<1x64xf32> to vector<64x64xf32>
    %10 = arith.addf %7, %9 : vector<64x64xf32>
    %cst = arith.constant 0.000000e+00 : f32
    %11 = vector.broadcast %cst : f32 to vector<64x64xf32>
    %12 = arith.cmpf ogt, %10, %11 : vector<64x64xf32>
    %cst_10 = arith.constant 0.000000e+00 : f32
    %13 = vector.broadcast %cst_10 : f32 to vector<64x64xf32>
    %14 = arith.minimumf %10, %13 : vector<64x64xf32>
    %15 = math.exp %14 : vector<64x64xf32>
    %cst_11 = arith.constant 1.000000e+00 : f32
    %16 = vector.broadcast %cst_11 : f32 to vector<64x64xf32>
    %17 = arith.subf %15, %16 : vector<64x64xf32>
    %18 = arith.select %12, %10, %17 : vector<64x64xi1>, vector<64x64xf32>
    %c1_12 = arith.constant 1 : index
    %c0_13 = arith.constant 0 : index
    %c0_14 = arith.constant 0 : index
    %19 = vector.load %arg3[%c1_12, %c0_13, %c0_14] : memref<3x64x128xf32, #tpu.memory_space<vmem>>, vector<1x64x128xf32>
    %20 = vector.shape_cast %19 : vector<1x64x128xf32> to vector<64x128xf32>
    %cst_15 = arith.constant dense<0.000000e+00> : vector<64x128xf32>
    %21 = tpu.matmul %18, %20, %cst_15 {dimension_numbers = #tpu.dot_dimension_numbers<[1], [0], [0], [1], [0, 0, 1, 1], [], []>} : vector<64x64xf32>, vector<64x128xf32>, vector<64x128xf32> -> vector<64x128xf32>
    %cst_16 = arith.constant dense<0.000000e+00> : vector<64x64xf32>
    %22 = tpu.matmul %2, %18, %cst_16 {dimension_numbers = #tpu.dot_dimension_numbers<[1], [0], [0], [1], [0, 0, 1, 1], [], []>} : vector<64x64xf32>, vector<64x64xf32>, vector<64x64xf32> -> vector<64x64xf32>
    %c0_17 = arith.constant 0 : index
    %c0_18 = arith.constant 0 : index
    %c0_19 = arith.constant 0 : index
    %23 = vector.load %arg3[%c0_17, %c0_18, %c0_19] : memref<3x64x128xf32, #tpu.memory_space<vmem>>, vector<1x64x128xf32>
    %24 = vector.shape_cast %23 : vector<1x64x128xf32> to vector<64x128xf32>
    %cst_20 = arith.constant dense<0.000000e+00> : vector<64x128xf32>
    %25 = tpu.matmul %22, %24, %cst_20 {dimension_numbers = #tpu.dot_dimension_numbers<[1], [0], [0], [1], [0, 0, 1, 1], [], []>} : vector<64x64xf32>, vector<64x128xf32>, vector<64x128xf32> -> vector<64x128xf32>
    %26 = arith.addf %21, %25 : vector<64x128xf32>
    %cst_21 = arith.constant dense<0.000000e+00> : vector<64x64xf32>
    %27 = tpu.matmul %4, %18, %cst_21 {dimension_numbers = #tpu.dot_dimension_numbers<[1], [0], [0], [1], [0, 0, 1, 1], [], []>} : vector<64x64xf32>, vector<64x64xf32>, vector<64x64xf32> -> vector<64x64xf32>
    %c2 = arith.constant 2 : index
    %c0_22 = arith.constant 0 : index
    %c0_23 = arith.constant 0 : index
    %28 = vector.load %arg3[%c2, %c0_22, %c0_23] : memref<3x64x128xf32, #tpu.memory_space<vmem>>, vector<1x64x128xf32>
    %29 = vector.shape_cast %28 : vector<1x64x128xf32> to vector<64x128xf32>
    %cst_24 = arith.constant dense<0.000000e+00> : vector<64x128xf32>
    %30 = tpu.matmul %27, %29, %cst_24 {dimension_numbers = #tpu.dot_dimension_numbers<[1], [0], [0], [1], [0, 0, 1, 1], [], []>} : vector<64x64xf32>, vector<64x128xf32>, vector<64x128xf32> -> vector<64x128xf32>
    %31 = arith.addf %26, %30 : vector<64x128xf32>
    %c0_25 = arith.constant 0 : index
    %c0_26 = arith.constant 0 : index
    %32 = vector.load %arg8[%c0_25, %c0_26] : memref<1x128xf32, #tpu.memory_space<vmem>>, vector<1x128xf32>
    %33 = vector.broadcast %32 : vector<1x128xf32> to vector<64x128xf32>
    %34 = arith.mulf %31, %33 : vector<64x128xf32>
    %c0_27 = arith.constant 0 : index
    %c0_28 = arith.constant 0 : index
    %35 = vector.load %arg9[%c0_27, %c0_28] : memref<1x128xf32, #tpu.memory_space<vmem>>, vector<1x128xf32>
    %36 = vector.broadcast %35 : vector<1x128xf32> to vector<64x128xf32>
    %37 = arith.addf %34, %36 : vector<64x128xf32>
    %cst_29 = arith.constant 0.000000e+00 : f32
    %38 = vector.broadcast %cst_29 : f32 to vector<64x128xf32>
    %39 = arith.cmpf ogt, %37, %38 : vector<64x128xf32>
    %cst_30 = arith.constant 0.000000e+00 : f32
    %40 = vector.broadcast %cst_30 : f32 to vector<64x128xf32>
    %41 = arith.minimumf %37, %40 : vector<64x128xf32>
    %42 = math.exp %41 : vector<64x128xf32>
    %cst_31 = arith.constant 1.000000e+00 : f32
    %43 = vector.broadcast %cst_31 : f32 to vector<64x128xf32>
    %44 = arith.subf %42, %43 : vector<64x128xf32>
    %45 = arith.select %39, %37, %44 : vector<64x128xi1>, vector<64x128xf32>
    %c1_32 = arith.constant 1 : index
    %c0_33 = arith.constant 0 : index
    %c0_34 = arith.constant 0 : index
    %46 = vector.load %arg4[%c1_32, %c0_33, %c0_34] : memref<3x128x128xf32, #tpu.memory_space<vmem>>, vector<1x128x128xf32>
    %47 = vector.shape_cast %46 : vector<1x128x128xf32> to vector<128x128xf32>
    %cst_35 = arith.constant dense<0.000000e+00> : vector<64x128xf32>
    %48 = tpu.matmul %45, %47, %cst_35 {dimension_numbers = #tpu.dot_dimension_numbers<[1], [0], [0], [1], [0, 0, 1, 1], [], []>} : vector<64x128xf32>, vector<128x128xf32>, vector<64x128xf32> -> vector<64x128xf32>
    %cst_36 = arith.constant dense<0.000000e+00> : vector<64x128xf32>
    %49 = tpu.matmul %2, %45, %cst_36 {dimension_numbers = #tpu.dot_dimension_numbers<[1], [0], [0], [1], [0, 0, 1, 1], [], []>} : vector<64x64xf32>, vector<64x128xf32>, vector<64x128xf32> -> vector<64x128xf32>
    %c0_37 = arith.constant 0 : index
    %c0_38 = arith.constant 0 : index
    %c0_39 = arith.constant 0 : index
    %50 = vector.load %arg4[%c0_37, %c0_38, %c0_39] : memref<3x128x128xf32, #tpu.memory_space<vmem>>, vector<1x128x128xf32>
    %51 = vector.shape_cast %50 : vector<1x128x128xf32> to vector<128x128xf32>
    %cst_40 = arith.constant dense<0.000000e+00> : vector<64x128xf32>
    %52 = tpu.matmul %49, %51, %cst_40 {dimension_numbers = #tpu.dot_dimension_numbers<[1], [0], [0], [1], [0, 0, 1, 1], [], []>} : vector<64x128xf32>, vector<128x128xf32>, vector<64x128xf32> -> vector<64x128xf32>
    %53 = arith.addf %48, %52 : vector<64x128xf32>
    %cst_41 = arith.constant dense<0.000000e+00> : vector<64x128xf32>
    %54 = tpu.matmul %4, %45, %cst_41 {dimension_numbers = #tpu.dot_dimension_numbers<[1], [0], [0], [1], [0, 0, 1, 1], [], []>} : vector<64x64xf32>, vector<64x128xf32>, vector<64x128xf32> -> vector<64x128xf32>
    %c2_42 = arith.constant 2 : index
    %c0_43 = arith.constant 0 : index
    %c0_44 = arith.constant 0 : index
    %55 = vector.load %arg4[%c2_42, %c0_43, %c0_44] : memref<3x128x128xf32, #tpu.memory_space<vmem>>, vector<1x128x128xf32>
    %56 = vector.shape_cast %55 : vector<1x128x128xf32> to vector<128x128xf32>
    %cst_45 = arith.constant dense<0.000000e+00> : vector<64x128xf32>
    %57 = tpu.matmul %54, %56, %cst_45 {dimension_numbers = #tpu.dot_dimension_numbers<[1], [0], [0], [1], [0, 0, 1, 1], [], []>} : vector<64x128xf32>, vector<128x128xf32>, vector<64x128xf32> -> vector<64x128xf32>
    %58 = arith.addf %53, %57 : vector<64x128xf32>
    %c0_46 = arith.constant 0 : index
    %c0_47 = arith.constant 0 : index
    %59 = vector.load %arg5[%c0_46, %c0_47] : memref<64x128xf32, #tpu.memory_space<vmem>>, vector<64x128xf32>
    %cst_48 = arith.constant dense<0.000000e+00> : vector<64x128xf32>
    %60 = tpu.matmul %0, %59, %cst_48 {dimension_numbers = #tpu.dot_dimension_numbers<[1], [0], [0], [1], [0, 0, 1, 1], [], []>} : vector<64x64xf32>, vector<64x128xf32>, vector<64x128xf32> -> vector<64x128xf32>
    %61 = arith.addf %58, %60 : vector<64x128xf32>
    %c0_49 = arith.constant 0 : index
    %c0_50 = arith.constant 0 : index
    %62 = vector.load %arg10[%c0_49, %c0_50] : memref<1x128xf32, #tpu.memory_space<vmem>>, vector<1x128xf32>
    %63 = vector.broadcast %62 : vector<1x128xf32> to vector<64x128xf32>
    %64 = arith.addf %61, %63 : vector<64x128xf32>
    %c0_51 = arith.constant 0 : index
    %c0_52 = arith.constant 0 : index
    %65 = vector.load %arg11[%c0_51, %c0_52] : memref<64x128xf32, #tpu.memory_space<vmem>>, vector<64x128xf32>
    tpu.vector_store %arg11[%c0_51, %c0_52], %64 {strides = array<i32>} : memref<64x128xf32, #tpu.memory_space<vmem>>, vector<64x128xf32>,
    return
  }
  func.func @transform_0(%arg0: i32) -> (i32, i32) {
    %c0_i32 = arith.constant 0 : i32
    %c0_i32_0 = arith.constant 0 : i32
    return %arg0, %c0_i32 : i32, i32
  }
  func.func @transform_1(%arg0: i32) -> (i32, i32, i32) {
    %c0_i32 = arith.constant 0 : i32
    %c0_i32_0 = arith.constant 0 : i32
    %c0_i32_1 = arith.constant 0 : i32
    %c0_i32_2 = arith.constant 0 : i32
    return %c0_i32, %c0_i32_0, %c0_i32_1 : i32, i32, i32
  }
  func.func @transform_2(%arg0: i32) -> (i32, i32, i32) {
    %c0_i32 = arith.constant 0 : i32
    %c0_i32_0 = arith.constant 0 : i32
    %c0_i32_1 = arith.constant 0 : i32
    %c0_i32_2 = arith.constant 0 : i32
    return %c0_i32, %c0_i32_0, %c0_i32_1 : i32, i32, i32
  }
  func.func @transform_3(%arg0: i32) -> (i32, i32, i32) {
    %c0_i32 = arith.constant 0 : i32
    %c0_i32_0 = arith.constant 0 : i32
    %c0_i32_1 = arith.constant 0 : i32
    %c0_i32_2 = arith.constant 0 : i32
    return %c0_i32, %c0_i32_0, %c0_i32_1 : i32, i32, i32
  }
  func.func @transform_4(%arg0: i32) -> (i32, i32) {
    %c0_i32 = arith.constant 0 : i32
    %c0_i32_0 = arith.constant 0 : i32
    %c0_i32_1 = arith.constant 0 : i32
    return %c0_i32, %c0_i32_0 : i32, i32
  }
  func.func @transform_5(%arg0: i32) -> (i32, i32) {
    %c0_i32 = arith.constant 0 : i32
    %c0_i32_0 = arith.constant 0 : i32
    %c0_i32_1 = arith.constant 0 : i32
    return %c0_i32, %c0_i32_0 : i32, i32
  }
  func.func @transform_6(%arg0: i32) -> (i32, i32) {
    %c0_i32 = arith.constant 0 : i32
    %c0_i32_0 = arith.constant 0 : i32
    %c0_i32_1 = arith.constant 0 : i32
    return %c0_i32, %c0_i32_0 : i32, i32
  }
  func.func @transform_7(%arg0: i32) -> (i32, i32) {
    %c0_i32 = arith.constant 0 : i32
    %c0_i32_0 = arith.constant 0 : i32
    %c0_i32_1 = arith.constant 0 : i32
    return %c0_i32, %c0_i32_0 : i32, i32
  }
  func.func @transform_8(%arg0: i32) -> (i32, i32) {
    %c0_i32 = arith.constant 0 : i32
    %c0_i32_0 = arith.constant 0 : i32
    %c0_i32_1 = arith.constant 0 : i32
    return %c0_i32, %c0_i32_0 : i32, i32
  }
  func.func @transform_9(%arg0: i32) -> (i32, i32) {
    %c0_i32 = arith.constant 0 : i32
    %c0_i32_0 = arith.constant 0 : i32
    %c0_i32_1 = arith.constant 0 : i32
    return %c0_i32, %c0_i32_0 : i32, i32
  }
  func.func @transform_10(%arg0: i32) -> (i32, i32) {
    %c0_i32 = arith.constant 0 : i32
    %c0_i32_0 = arith.constant 0 : i32
    return %arg0, %c0_i32 : i32, i32
  }
}

</mosaic_0001>

<llo_original>
// kernel: tile.28
$region0: #{tile.28}
  #allocation0 [shape = 's32[1]{0}', space=sflag, size = 0x4, scoped, tag = 'scoped memory for tile.28']
  %s0 = inlined_call_operand.vmem [shape: f32[4], index: 0, kind: input, shape index: {}]
  %s1 = inlined_call_operand.vmem [shape: f32[16,4], index: 1, kind: output, shape index: {}]
  // Predicated region
  $region2: #{tile.28} parent=0 // pred_check
    _
  $region3: #{tile.28} parent=0 // pred_check_branch
    %3 = sbr.rel (0) target = $region5
  $region4: #{tile.28} parent=0 // pred_region
    _
  $region5: #{tile.28} parent=0 // pred_fallthru
    _
  %v4 = vld [vmem:[%s0] ss:$0 sm:$0xff]
  %5 = vst [vmem:[%s1] sm:$0xff] %v4
  %s6 = scalar_lea.vmem %s1, 8
  %7 = vst [vmem:[%s6] sm:$0xff] %v4

// kernel: tile.29
$region0: #{tile.29}
  %s0 = inlined_call_operand.vmem [shape: f32[16,4], index: 0, kind: input, shape index: {}]
  %s1 = inlined_call_operand.vmem [shape: f32[1,64], index: 1, kind: output, shape index: {}]
  $region1: #{tile.29} parent=0
    #allocation0 [shape = 'u8[4096]{0}', space=vmem, size = 0x1000, scoped, tag = 'scoped mem for output reshape']
    %v2 = vld [vmem:[%s0] sm:$0x1]
    %vm3 = vcmask 31744
    %4 = vst.msk [vmem:[#allocation0] sm:$0x1] %vm3, %v2
    %s5 = scalar_lea.vmem %s0, 15
    %v6 = vld [vmem:[%s5] sm:$0x1]
    %7 = vrot.lane.b32.xlu0 %v6, 60
    %v8 = vpop.permute.xlu0 %7
    %vm9 = vcmask 523744
    %10 = vst.msk [vmem:[#allocation0] sm:$0x1] %vm9, %v8
    %s11 = scalar_lea.vmem %s0, 14
    %v12 = vld [vmem:[%s11] sm:$0x1]
    %13 = vrot.lane.b32.xlu0 %v12, 56
    %v14 = vpop.permute.xlu0 %13
    %vm15 = vcmask 490944
    %16 = vst.msk [vmem:[#allocation0] sm:$0x1] %vm15, %v14
    %s17 = scalar_lea.vmem %s0, 13
    %v18 = vld [vmem:[%s17] sm:$0x1]
    %19 = vrot.lane.b32.xlu0 %v18, 52
    %v20 = vpop.permute.xlu0 %19
    %vm21 = vcmask 458144
    %22 = vst.msk [vmem:[#allocation0] sm:$0x1] %vm21, %v20
    %s23 = scalar_lea.vmem %s0, 12
    %v24 = vld [vmem:[%s23] sm:$0x1]
    %25 = vrot.lane.b32.xlu0 %v24, 48
    %v26 = vpop.permute.xlu0 %25
    %vm27 = vcmask 425344
    %28 = vst.msk [vmem:[#allocation0] sm:$0x1] %vm27, %v26
    %s29 = scalar_lea.vmem %s0, 11
    %v30 = vld [vmem:[%s29] sm:$0x1]
    %31 = vrot.lane.b32.xlu0 %v30, 44
    %v32 = vpop.permute.xlu0 %31
    %vm33 = vcmask 392544
    %34 = vst.msk [vmem:[#allocation0] sm:$0x1] %vm33, %v32
    %s35 = scalar_lea.vmem %s0, 10
    %v36 = vld [vmem:[%s35] sm:$0x1]
    %37 = vrot.lane.b32.xlu0 %v36, 40
    %v38 = vpop.permute.xlu0 %37
    %vm39 = vcmask 359744
    %40 = vst.msk [vmem:[#allocation0] sm:$0x1] %vm39, %v38
    %s41 = scalar_lea.vmem %s0, 9
    %v42 = vld [vmem:[%s41] sm:$0x1]
    %43 = vrot.lane.b32.xlu0 %v42, 36
    %v44 = vpop.permute.xlu0 %43
    %vm45 = vcmask 326944
    %46 = vst.msk [vmem:[#allocation0] sm:$0x1] %vm45, %v44
    %s47 = scalar_lea.vmem %s0, 8
    %v48 = vld [vmem:[%s47] sm:$0x1]
    %49 = vrot.lane.b32.xlu0 %v48, 32
    %v50 = vpop.permute.xlu0 %49
    %vm51 = vcmask 294144
    %52 = vst.msk [vmem:[#allocation0] sm:$0x1] %vm51, %v50
    %s53 = scalar_lea.vmem %s0, 7
    %v54 = vld [vmem:[%s53] sm:$0x1]
    %55 = vrot.lane.b32.xlu0 %v54, 28
    %v56 = vpop.permute.xlu0 %55
    %vm57 = vcmask 261344
    %58 = vst.msk [vmem:[#allocation0] sm:$0x1] %vm57, %v56
    %s59 = scalar_lea.vmem %s0, 6
    %v60 = vld [vmem:[%s59] sm:$0x1]
    %61 = vrot.lane.b32.xlu0 %v60, 24
    %v62 = vpop.permute.xlu0 %61
    %vm63 = vcmask 228544
    %64 = vst.msk [vmem:[#allocation0] sm:$0x1] %vm63, %v62
    %s65 = scalar_lea.vmem %s0, 5
    %v66 = vld [vmem:[%s65] sm:$0x1]
    %67 = vrot.lane.b32.xlu0 %v66, 20
    %v68 = vpop.permute.xlu0 %67
    %vm69 = vcmask 195744
    %70 = vst.msk [vmem:[#allocation0] sm:$0x1] %vm69, %v68
    %s71 = scalar_lea.vmem %s0, 4
    %v72 = vld [vmem:[%s71] sm:$0x1]
    %73 = vrot.lane.b32.xlu0 %v72, 16
    %v74 = vpop.permute.xlu0 %73
    %vm75 = vcmask 162944
    %76 = vst.msk [vmem:[#allocation0] sm:$0x1] %vm75, %v74
    %s77 = scalar_lea.vmem %s0, 3
    %v78 = vld [vmem:[%s77] sm:$0x1]
    %79 = vrot.lane.b32.xlu0 %v78, 12
    %v80 = vpop.permute.xlu0 %79
    %vm81 = vcmask 130144
    %82 = vst.msk [vmem:[#allocation0] sm:$0x1] %vm81, %v80
    %s83 = scalar_lea.vmem %s0, 2
    %v84 = vld [vmem:[%s83] sm:$0x1]
    %85 = vrot.lane.b32.xlu0 %v84, 8
    %v86 = vpop.permute.xlu0 %85
    %vm87 = vcmask 97344
    %88 = vst.msk [vmem:[#allocation0] sm:$0x1] %vm87, %v86
    %s89 = scalar_lea.vmem %s0, 1
    %v90 = vld [vmem:[%s89] sm:$0x1]
    %91 = vrot.lane.b32.xlu0 %v90, 4
    %v92 = vpop.permute.xlu0 %91
    %vm93 = vcmask 64544
    %94 = vst.msk [vmem:[#allocation0] sm:$0x1] %vm93, %v92
    %s96 = sshll.u32 1, 1
    %s97 = ssub.s32 %s96, 1
    %v99 = vld [vmem:[#allocation0] sm:%s97]
    %s100 = sshll.u32 1, 1
    %s101 = ssub.s32 %s100, 1
    %102 = vst [vmem:[%s1] sm:%s101] %v99

// kernel: tile.38
$region0: #{tile.38}
  #allocation0 [shape = 's32[1]{0}', space=sflag, size = 0x4, scoped, tag = 'scoped memory for tile.38']
  %s0 = inlined_call_operand.vmem [shape: f32[8], index: 0, kind: input, shape index: {}]
  %s1 = inlined_call_operand.vmem [shape: f32[16,8], index: 1, kind: output, shape index: {}]
  // Predicated region
  $region2: #{tile.38} parent=0 // pred_check
    _
  $region3: #{tile.38} parent=0 // pred_check_branch
    %3 = sbr.rel (0) target = $region5
  $region4: #{tile.38} parent=0 // pred_region
    _
  $region5: #{tile.38} parent=0 // pred_fallthru
    _
  %v4 = vld [vmem:[%s0] ss:$0 sm:$0xff]
  %5 = vst [vmem:[%s1] sm:$0xff] %v4
  %s6 = scalar_lea.vmem %s1, 8
  %7 = vst [vmem:[%s6] sm:$0xff] %v4

// kernel: tile.39
$region0: #{tile.39}
  %s0 = inlined_call_operand.vmem [shape: f32[16,8], index: 0, kind: input, shape index: {}]
  %s1 = inlined_call_operand.vmem [shape: f32[1,128], index: 1, kind: output, shape index: {}]
  $region1: #{tile.39} parent=0
    #allocation0 [shape = 'u8[4096]{0}', space=vmem, size = 0x1000, scoped, tag = 'scoped mem for output reshape']
    %v2 = vld [vmem:[%s0] sm:$0x1]
    %vm3 = vcmask 64512
    %4 = vst.msk [vmem:[#allocation0] sm:$0x1] %vm3, %v2
    %s5 = scalar_lea.vmem %s0, 15
    %v6 = vld [vmem:[%s5] sm:$0x1]
    %7 = vrot.lane.b32.xlu0 %v6, 120
    %v8 = vpop.permute.xlu0 %7
    %vm9 = vcmask 1048512
    %10 = vst.msk [vmem:[#allocation0] sm:$0x1] %vm9, %v8
    %s11 = scalar_lea.vmem %s0, 14
    %v12 = vld [vmem:[%s11] sm:$0x1]
    %13 = vrot.lane.b32.xlu0 %v12, 112
    %v14 = vpop.permute.xlu0 %13
    %vm15 = vcmask 982912
    %16 = vst.msk [vmem:[#allocation0] sm:$0x1] %vm15, %v14
    %s17 = scalar_lea.vmem %s0, 13
    %v18 = vld [vmem:[%s17] sm:$0x1]
    %19 = vrot.lane.b32.xlu0 %v18, 104
    %v20 = vpop.permute.xlu0 %19
    %vm21 = vcmask 917312
    %22 = vst.msk [vmem:[#allocation0] sm:$0x1] %vm21, %v20
    %s23 = scalar_lea.vmem %s0, 12
    %v24 = vld [vmem:[%s23] sm:$0x1]
    %25 = vrot.lane.b32.xlu0 %v24, 96
    %v26 = vpop.permute.xlu0 %25
    %vm27 = vcmask 851712
    %28 = vst.msk [vmem:[#allocation0] sm:$0x1] %vm27, %v26
    %s29 = scalar_lea.vmem %s0, 11
    %v30 = vld [vmem:[%s29] sm:$0x1]
    %31 = vrot.lane.b32.xlu0 %v30, 88
    %v32 = vpop.permute.xlu0 %31
    %vm33 = vcmask 786112
    %34 = vst.msk [vmem:[#allocation0] sm:$0x1] %vm33, %v32
    %s35 = scalar_lea.vmem %s0, 10
    %v36 = vld [vmem:[%s35] sm:$0x1]
    %37 = vrot.lane.b32.xlu0 %v36, 80
    %v38 = vpop.permute.xlu0 %37
    %vm39 = vcmask 720512
    %40 = vst.msk [vmem:[#allocation0] sm:$0x1] %vm39, %v38
    %s41 = scalar_lea.vmem %s0, 9
    %v42 = vld [vmem:[%s41] sm:$0x1]
    %43 = vrot.lane.b32.xlu0 %v42, 72
    %v44 = vpop.permute.xlu0 %43
    %vm45 = vcmask 654912
    %46 = vst.msk [vmem:[#allocation0] sm:$0x1] %vm45, %v44
    %s47 = scalar_lea.vmem %s0, 8
    %v48 = vld [vmem:[%s47] sm:$0x1]
    %49 = vrot.lane.b32.xlu0 %v48, 64
    %v50 = vpop.permute.xlu0 %49
    %vm51 = vcmask 589312
    %52 = vst.msk [vmem:[#allocation0] sm:$0x1] %vm51, %v50
    %s53 = scalar_lea.vmem %s0, 7
    %v54 = vld [vmem:[%s53] sm:$0x1]
    %55 = vrot.lane.b32.xlu0 %v54, 56
    %v56 = vpop.permute.xlu0 %55
    %vm57 = vcmask 523712
    %58 = vst.msk [vmem:[#allocation0] sm:$0x1] %vm57, %v56
    %s59 = scalar_lea.vmem %s0, 6
    %v60 = vld [vmem:[%s59] sm:$0x1]
    %61 = vrot.lane.b32.xlu0 %v60, 48
    %v62 = vpop.permute.xlu0 %61
    %vm63 = vcmask 458112
    %64 = vst.msk [vmem:[#allocation0] sm:$0x1] %vm63, %v62
    %s65 = scalar_lea.vmem %s0, 5
    %v66 = vld [vmem:[%s65] sm:$0x1]
    %67 = vrot.lane.b32.xlu0 %v66, 40
    %v68 = vpop.permute.xlu0 %67
    %vm69 = vcmask 392512
    %70 = vst.msk [vmem:[#allocation0] sm:$0x1] %vm69, %v68
    %s71 = scalar_lea.vmem %s0, 4
    %v72 = vld [vmem:[%s71] sm:$0x1]
    %73 = vrot.lane.b32.xlu0 %v72, 32
    %v74 = vpop.permute.xlu0 %73
    %vm75 = vcmask 326912
    %76 = vst.msk [vmem:[#allocation0] sm:$0x1] %vm75, %v74
    %s77 = scalar_lea.vmem %s0, 3
    %v78 = vld [vmem:[%s77] sm:$0x1]
    %79 = vrot.lane.b32.xlu0 %v78, 24
    %v80 = vpop.permute.xlu0 %79
    %vm81 = vcmask 261312
    %82 = vst.msk [vmem:[#allocation0] sm:$0x1] %vm81, %v80
    %s83 = scalar_lea.vmem %s0, 2
    %v84 = vld [vmem:[%s83] sm:$0x1]
    %85 = vrot.lane.b32.xlu0 %v84, 16
    %v86 = vpop.permute.xlu0 %85
    %vm87 = vcmask 195712
    %88 = vst.msk [vmem:[#allocation0] sm:$0x1] %vm87, %v86
    %s89 = scalar_lea.vmem %s0, 1
    %v90 = vld [vmem:[%s89] sm:$0x1]
    %91 = vrot.lane.b32.xlu0 %v90, 8
    %v92 = vpop.permute.xlu0 %91
    %vm93 = vcmask 130112
    %94 = vst.msk [vmem:[#allocation0] sm:$0x1] %vm93, %v92
    %s96 = sshll.u32 1, 1
    %s97 = ssub.s32 %s96, 1
    %v99 = vld [vmem:[#allocation0] sm:%s97]
    %s100 = sshll.u32 1, 1
    %s101 = ssub.s32 %s100, 1
    %102 = vst [vmem:[%s1] sm:%s101] %v99

// kernel: basic_block_3d_pa_pallas.1
$region0: #{basic_block_3d_pa_pallas.1}
  #allocation0 [shape = 'u32[]', space=smem, size = 0x4, offset = 0x4, fixed_abs, tag = 'smem constant byte address 0x4 - core index']
  #allocation1 [shape = 'u32[144,128]{1,0:T(1,128)}', space=vmem, size = 0x12000, scoped, tag = 'internal scratch']
  %s0 = inlined_call_operand.vmem [shape: f32[128,64], index: 0, kind: input, shape index: {}]
  %s1 = inlined_call_operand.vmem [shape: f32[2,64,64], index: 1, kind: input, shape index: {}]
  %s2 = inlined_call_operand.vmem [shape: f32[3,64,128], index: 2, kind: input, shape index: {}]
  %s3 = inlined_call_operand.vmem [shape: f32[3,128,128], index: 3, kind: input, shape index: {}]
  %s4 = inlined_call_operand.vmem [shape: f32[64,128], index: 4, kind: input, shape index: {}]
  %s5 = inlined_call_operand.vmem [shape: f32[1,64], index: 5, kind: input, shape index: {}]
  %s6 = inlined_call_operand.vmem [shape: f32[1,64], index: 6, kind: input, shape index: {}]
  %s7 = inlined_call_operand.vmem [shape: f32[1,128], index: 7, kind: input, shape index: {}]
  %s8 = inlined_call_operand.vmem [shape: f32[1,128], index: 8, kind: input, shape index: {}]
  %s9 = inlined_call_operand.vmem [shape: f32[1,128], index: 9, kind: input, shape index: {}]
  %s10 = inlined_call_operand.vmem [shape: f32[128,128], index: 10, kind: output, shape index: {}]
  %s11 = sld [smem:[#allocation0]]
  $region73: #{basic_block_3d_pa_pallas.1} parent=0
    _
  %s13 = ssub.s32 1, %s11
  %s14 = scalar_select 0, %s13, %s11
  loop: start=0, step=1, limit=4
  $region2: #{basic_block_3d_pa_pallas.1} parent=0 // loop_pre_header
    _
  $region3: #{basic_block_3d_pa_pallas.1} parent=0 // loop_header
    %s16 = sphi 0, %s20
    %p17 = scmp.ge.s32.totalorder %s16, 4
    %s26 = sphi 0, %s28
    %s29 = sphi 0, %s26
    %s30 = sphi 0, %s29
    %s46 = sphi 0, %s30
    %s50 = sphi 0, %s50
    %s52 = sphi 0, %s50
    %s53 = sphi 0, %s52
    %s67 = sphi 0, %s53
    %s71 = sphi 0, %s71
    %s73 = sphi 0, %s71
    %s74 = sphi 0, %s73
    %s88 = sphi 0, %s74
    %s92 = sphi 0, %s92
    %s94 = sphi 0, %s92
    %s95 = sphi 0, %s94
    %s109 = sphi 0, %s95
    %s113 = sphi 0, %s113
    %s115 = sphi 0, %s113
    %s116 = sphi 0, %s115
    %s130 = sphi 0, %s116
    %s134 = sphi 0, %s134
    %s136 = sphi 0, %s134
    %s137 = sphi 0, %s136
    %s151 = sphi 0, %s137
    %s155 = sphi 0, %s155
    %s157 = sphi 0, %s155
    %s158 = sphi 0, %s157
    %s172 = sphi 0, %s158
    %s176 = sphi 0, %s176
    %s178 = sphi 0, %s176
    %s179 = sphi 0, %s178
    %s193 = sphi 0, %s179
    %s197 = sphi 0, %s197
    %s199 = sphi 0, %s197
    %s200 = sphi 0, %s199
    %s214 = sphi 0, %s200
    %s218 = sphi 0, %s218
    %s220 = sphi 0, %s218
    %s221 = sphi 0, %s220
    %s235 = sphi 0, %s221
    %s241 = sphi 0, %s243
    %s244 = sphi 0, %s241
    %s245 = sphi 0, %s244
    %s261 = sphi 0, %s245
  $region4: #{basic_block_3d_pa_pallas.1} parent=0 // loop_header_branch
    %19 = sbr.rel (%p17) target = $region8
  $region5: #{basic_block_3d_pa_pallas.1} parent=0 // loop_body
    %s21 = ssub.s32 %s16, 1
    %s22 = ssub.s32 %s16, 2
    %s23 = sadd.s32 %s16, 1
    %s24 = ssub.s32 %s16, %s23
    %p25 = scmp.eq.s32.totalorder %s24, 0
    %s27 = sadd.s32 %s26, 1
    %s28 = scalar_select %p25, %s26, %s27
    %p31 = pneg %p25
    %p32 = scmp.eq.s32.totalorder %s16, 1
    %p33 = por %p31, %p32
    %p34 = scmp.ne.s32.totalorder %s26, %s29
    %p35 = scmp.eq.s32.totalorder %s16, 0
    %p36 = por %p34, %p35
    %p37 = scmp.ne.s32.totalorder %s26, %s29
    %p38 = scmp.eq.s32.totalorder %s21, 1
    %p39 = por %p37, %p38
    %p40 = scmp.ne.s32.totalorder %s29, %s30
    %p41 = scmp.eq.s32.totalorder %s21, 0
    %p42 = por %p40, %p41
    %p43 = scmp.ne.s32.totalorder %s29, %s30
    %p44 = scmp.eq.s32.totalorder %s22, 1
    %p45 = por %p43, %p44
    %p47 = scmp.ne.s32.totalorder %s30, %s46
    %p48 = scmp.eq.s32.totalorder %s22, 0
    %p49 = por %p47, %p48
    %s51 = sadd.s32 %s50, 1
    %p54 = scmp.eq.s32.totalorder %s16, 1
    %p55 = scmp.ne.s32.totalorder %s50, %s52
    %p56 = scmp.eq.s32.totalorder %s16, 0
    %p57 = por %p55, %p56
    %p58 = scmp.ne.s32.totalorder %s50, %s52
    %p59 = scmp.eq.s32.totalorder %s21, 1
    %p60 = por %p58, %p59
    %p61 = scmp.ne.s32.totalorder %s52, %s53
    %p62 = scmp.eq.s32.totalorder %s21, 0
    %p63 = por %p61, %p62
    %p64 = scmp.ne.s32.totalorder %s52, %s53
    %p65 = scmp.eq.s32.totalorder %s22, 1
    %p66 = por %p64, %p65
    %p68 = scmp.ne.s32.totalorder %s53, %s67
    %p69 = scmp.eq.s32.totalorder %s22, 0
    %p70 = por %p68, %p69
    %s72 = sadd.s32 %s71, 1
    %p75 = scmp.eq.s32.totalorder %s16, 1
    %p76 = scmp.ne.s32.totalorder %s71, %s73
    %p77 = scmp.eq.s32.totalorder %s16, 0
    %p78 = por %p76, %p77
    %p79 = scmp.ne.s32.totalorder %s71, %s73
    %p80 = scmp.eq.s32.totalorder %s21, 1
    %p81 = por %p79, %p80
    %p82 = scmp.ne.s32.totalorder %s73, %s74
    %p83 = scmp.eq.s32.totalorder %s21, 0
    %p84 = por %p82, %p83
    %p85 = scmp.ne.s32.totalorder %s73, %s74
    %p86 = scmp.eq.s32.totalorder %s22, 1
    %p87 = por %p85, %p86
    %p89 = scmp.ne.s32.totalorder %s74, %s88
    %p90 = scmp.eq.s32.totalorder %s22, 0
    %p91 = por %p89, %p90
    %s93 = sadd.s32 %s92, 1
    %p96 = scmp.eq.s32.totalorder %s16, 1
    %p97 = scmp.ne.s32.totalorder %s92, %s94
    %p98 = scmp.eq.s32.totalorder %s16, 0
    %p99 = por %p97, %p98
    %p100 = scmp.ne.s32.totalorder %s92, %s94
    %p101 = scmp.eq.s32.totalorder %s21, 1
    %p102 = por %p100, %p101
    %p103 = scmp.ne.s32.totalorder %s94, %s95
    %p104 = scmp.eq.s32.totalorder %s21, 0
    %p105 = por %p103, %p104
    %p106 = scmp.ne.s32.totalorder %s94, %s95
    %p107 = scmp.eq.s32.totalorder %s22, 1
    %p108 = por %p106, %p107
    %p110 = scmp.ne.s32.totalorder %s95, %s109
    %p111 = scmp.eq.s32.totalorder %s22, 0
    %p112 = por %p110, %p111
    %s114 = sadd.s32 %s113, 1
    %p117 = scmp.eq.s32.totalorder %s16, 1
    %p118 = scmp.ne.s32.totalorder %s113, %s115
    %p119 = scmp.eq.s32.totalorder %s16, 0
    %p120 = por %p118, %p119
    %p121 = scmp.ne.s32.totalorder %s113, %s115
    %p122 = scmp.eq.s32.totalorder %s21, 1
    %p123 = por %p121, %p122
    %p124 = scmp.ne.s32.totalorder %s115, %s116
    %p125 = scmp.eq.s32.totalorder %s21, 0
    %p126 = por %p124, %p125
    %p127 = scmp.ne.s32.totalorder %s115, %s116
    %p128 = scmp.eq.s32.totalorder %s22, 1
    %p129 = por %p127, %p128
    %p131 = scmp.ne.s32.totalorder %s116, %s130
    %p132 = scmp.eq.s32.totalorder %s22, 0
    %p133 = por %p131, %p132
    %s135 = sadd.s32 %s134, 1
    %p138 = scmp.eq.s32.totalorder %s16, 1
    %p139 = scmp.ne.s32.totalorder %s134, %s136
    %p140 = scmp.eq.s32.totalorder %s16, 0
    %p141 = por %p139, %p140
    %p142 = scmp.ne.s32.totalorder %s134, %s136
    %p143 = scmp.eq.s32.totalorder %s21, 1
    %p144 = por %p142, %p143
    %p145 = scmp.ne.s32.totalorder %s136, %s137
    %p146 = scmp.eq.s32.totalorder %s21, 0
    %p147 = por %p145, %p146
    %p148 = scmp.ne.s32.totalorder %s136, %s137
    %p149 = scmp.eq.s32.totalorder %s22, 1
    %p150 = por %p148, %p149
    %p152 = scmp.ne.s32.totalorder %s137, %s151
    %p153 = scmp.eq.s32.totalorder %s22, 0
    %p154 = por %p152, %p153
    %s156 = sadd.s32 %s155, 1
    %p159 = scmp.eq.s32.totalorder %s16, 1
    %p160 = scmp.ne.s32.totalorder %s155, %s157
    %p161 = scmp.eq.s32.totalorder %s16, 0
    %p162 = por %p160, %p161
    %p163 = scmp.ne.s32.totalorder %s155, %s157
    %p164 = scmp.eq.s32.totalorder %s21, 1
    %p165 = por %p163, %p164
    %p166 = scmp.ne.s32.totalorder %s157, %s158
    %p167 = scmp.eq.s32.totalorder %s21, 0
    %p168 = por %p166, %p167
    %p169 = scmp.ne.s32.totalorder %s157, %s158
    %p170 = scmp.eq.s32.totalorder %s22, 1
    %p171 = por %p169, %p170
    %p173 = scmp.ne.s32.totalorder %s158, %s172
    %p174 = scmp.eq.s32.totalorder %s22, 0
    %p175 = por %p173, %p174
    %s177 = sadd.s32 %s176, 1
    %p180 = scmp.eq.s32.totalorder %s16, 1
    %p181 = scmp.ne.s32.totalorder %s176, %s178
    %p182 = scmp.eq.s32.totalorder %s16, 0
    %p183 = por %p181, %p182
    %p184 = scmp.ne.s32.totalorder %s176, %s178
    %p185 = scmp.eq.s32.totalorder %s21, 1
    %p186 = por %p184, %p185
    %p187 = scmp.ne.s32.totalorder %s178, %s179
    %p188 = scmp.eq.s32.totalorder %s21, 0
    %p189 = por %p187, %p188
    %p190 = scmp.ne.s32.totalorder %s178, %s179
    %p191 = scmp.eq.s32.totalorder %s22, 1
    %p192 = por %p190, %p191
    %p194 = scmp.ne.s32.totalorder %s179, %s193
    %p195 = scmp.eq.s32.totalorder %s22, 0
    %p196 = por %p194, %p195
    %s198 = sadd.s32 %s197, 1
    %p201 = scmp.eq.s32.totalorder %s16, 1
    %p202 = scmp.ne.s32.totalorder %s197, %s199
    %p203 = scmp.eq.s32.totalorder %s16, 0
    %p204 = por %p202, %p203
    %p205 = scmp.ne.s32.totalorder %s197, %s199
    %p206 = scmp.eq.s32.totalorder %s21, 1
    %p207 = por %p205, %p206
    %p208 = scmp.ne.s32.totalorder %s199, %s200
    %p209 = scmp.eq.s32.totalorder %s21, 0
    %p210 = por %p208, %p209
    %p211 = scmp.ne.s32.totalorder %s199, %s200
    %p212 = scmp.eq.s32.totalorder %s22, 1
    %p213 = por %p211, %p212
    %p215 = scmp.ne.s32.totalorder %s200, %s214
    %p216 = scmp.eq.s32.totalorder %s22, 0
    %p217 = por %p215, %p216
    %s219 = sadd.s32 %s218, 1
    %p222 = scmp.eq.s32.totalorder %s16, 1
    %p223 = scmp.ne.s32.totalorder %s218, %s220
    %p224 = scmp.eq.s32.totalorder %s16, 0
    %p225 = por %p223, %p224
    %p226 = scmp.ne.s32.totalorder %s218, %s220
    %p227 = scmp.eq.s32.totalorder %s21, 1
    %p228 = por %p226, %p227
    %p229 = scmp.ne.s32.totalorder %s220, %s221
    %p230 = scmp.eq.s32.totalorder %s21, 0
    %p231 = por %p229, %p230
    %p232 = scmp.ne.s32.totalorder %s220, %s221
    %p233 = scmp.eq.s32.totalorder %s22, 1
    %p234 = por %p232, %p233
    %p236 = scmp.ne.s32.totalorder %s221, %s235
    %p237 = scmp.eq.s32.totalorder %s22, 0
    %p238 = por %p236, %p237
    %s239 = ssub.s32 %s16, %s23
    %p240 = scmp.eq.s32.totalorder %s239, 0
    %s242 = sadd.s32 %s241, 1
    %s243 = scalar_select %p240, %s241, %s242
    %p246 = pneg %p240
    %p247 = scmp.eq.s32.totalorder %s16, 1
    %p248 = por %p246, %p247
    %p249 = scmp.ne.s32.totalorder %s241, %s244
    %p250 = scmp.eq.s32.totalorder %s16, 0
    %p251 = por %p249, %p250
    %p252 = scmp.ne.s32.totalorder %s241, %s244
    %p253 = scmp.eq.s32.totalorder %s21, 1
    %p254 = por %p252, %p253
    %p255 = scmp.ne.s32.totalorder %s244, %s245
    %p256 = scmp.eq.s32.totalorder %s21, 0
    %p257 = por %p255, %p256
    %p258 = scmp.ne.s32.totalorder %s244, %s245
    %p259 = scmp.eq.s32.totalorder %s22, 1
    %p260 = por %p258, %p259
    %p262 = scmp.ne.s32.totalorder %s245, %s261
    %p263 = scmp.eq.s32.totalorder %s22, 0
    %p264 = por %p262, %p263
    %p265 = scmp.le.s32.totalorder 1, %s16
    %p266 = scmp.lt.s32.totalorder %s16, 3
    %p267 = pnand %p265, %p266
    %p268 = pneg %p267
    // Predicated region
    $region9: #{basic_block_3d_pa_pallas.1} parent=5 // pred_check
      _
    $region10: #{basic_block_3d_pa_pallas.1} parent=5 // pred_check_branch
      %270 = sbr.rel (%p267) target = $region12
    $region11: #{basic_block_3d_pa_pallas.1} parent=5 // pred_region
      %s271 = ssub.s32 %s16, 1
      // Predicated region
      $region13: #{basic_block_3d_pa_pallas.1} parent=11 // pred_check
        %p272 = pneg %p63
      $region14: #{basic_block_3d_pa_pallas.1} parent=11 // pred_check_branch
        %274 = sbr.rel (%p272) target = $region16
      $region15: #{basic_block_3d_pa_pallas.1} parent=11 // pred_region
        _
      $region16: #{basic_block_3d_pa_pallas.1} parent=11 // pred_fallthru
        _
      // Predicated region
      $region17: #{basic_block_3d_pa_pallas.1} parent=11 // pred_check
        %p275 = pneg %p84
      $region18: #{basic_block_3d_pa_pallas.1} parent=11 // pred_check_branch
        %277 = sbr.rel (%p275) target = $region20
      $region19: #{basic_block_3d_pa_pallas.1} parent=11 // pred_region
        _
      $region20: #{basic_block_3d_pa_pallas.1} parent=11 // pred_fallthru
        _
      // Predicated region
      $region21: #{basic_block_3d_pa_pallas.1} parent=11 // pred_check
        %p278 = pneg %p105
      $region22: #{basic_block_3d_pa_pallas.1} parent=11 // pred_check_branch
        %280 = sbr.rel (%p278) target = $region24
      $region23: #{basic_block_3d_pa_pallas.1} parent=11 // pred_region
        _
      $region24: #{basic_block_3d_pa_pallas.1} parent=11 // pred_fallthru
        _
      // Predicated region
      $region25: #{basic_block_3d_pa_pallas.1} parent=11 // pred_check
        %p281 = pneg %p126
      $region26: #{basic_block_3d_pa_pallas.1} parent=11 // pred_check_branch
        %283 = sbr.rel (%p281) target = $region28
      $region27: #{basic_block_3d_pa_pallas.1} parent=11 // pred_region
        _
      $region28: #{basic_block_3d_pa_pallas.1} parent=11 // pred_fallthru
        _
      // Predicated region
      $region29: #{basic_block_3d_pa_pallas.1} parent=11 // pred_check
        %p284 = pneg %p147
      $region30: #{basic_block_3d_pa_pallas.1} parent=11 // pred_check_branch
        %286 = sbr.rel (%p284) target = $region32
      $region31: #{basic_block_3d_pa_pallas.1} parent=11 // pred_region
        _
      $region32: #{basic_block_3d_pa_pallas.1} parent=11 // pred_fallthru
        _
      // Predicated region
      $region33: #{basic_block_3d_pa_pallas.1} parent=11 // pred_check
        %p287 = pneg %p168
      $region34: #{basic_block_3d_pa_pallas.1} parent=11 // pred_check_branch
        %289 = sbr.rel (%p287) target = $region36
      $region35: #{basic_block_3d_pa_pallas.1} parent=11 // pred_region
        _
      $region36: #{basic_block_3d_pa_pallas.1} parent=11 // pred_fallthru
        _
      // Predicated region
      $region37: #{basic_block_3d_pa_pallas.1} parent=11 // pred_check
        %p290 = pneg %p189
      $region38: #{basic_block_3d_pa_pallas.1} parent=11 // pred_check_branch
        %292 = sbr.rel (%p290) target = $region40
      $region39: #{basic_block_3d_pa_pallas.1} parent=11 // pred_region
        _
      $region40: #{basic_block_3d_pa_pallas.1} parent=11 // pred_fallthru
        _
      // Predicated region
      $region41: #{basic_block_3d_pa_pallas.1} parent=11 // pred_check
        %p293 = pneg %p210
      $region42: #{basic_block_3d_pa_pallas.1} parent=11 // pred_check_branch
        %295 = sbr.rel (%p293) target = $region44
      $region43: #{basic_block_3d_pa_pallas.1} parent=11 // pred_region
        _
      $region44: #{basic_block_3d_pa_pallas.1} parent=11 // pred_fallthru
        _
      // Predicated region
      $region45: #{basic_block_3d_pa_pallas.1} parent=11 // pred_check
        %p296 = pneg %p231
      $region46: #{basic_block_3d_pa_pallas.1} parent=11 // pred_check_branch
        %298 = sbr.rel (%p296) target = $region48
      $region47: #{basic_block_3d_pa_pallas.1} parent=11 // pred_region
        _
      $region48: #{basic_block_3d_pa_pallas.1} parent=11 // pred_fallthru
        _
    $region12: #{basic_block_3d_pa_pallas.1} parent=5 // pred_fallthru
      _
    %p299 = scmp.lt.s32.totalorder %s16, 2
    // Predicated region
    $region49: #{basic_block_3d_pa_pallas.1} parent=5 // pred_check
      %p300 = pneg %p299
    $region50: #{basic_block_3d_pa_pallas.1} parent=5 // pred_check_branch
      %302 = sbr.rel (%p300) target = $region52
    $region51: #{basic_block_3d_pa_pallas.1} parent=5 // pred_region
      // Predicated region
      $region53: #{basic_block_3d_pa_pallas.1} parent=51 // pred_check
        %p303 = pneg %p36
      $region54: #{basic_block_3d_pa_pallas.1} parent=51 // pred_check_branch
        %305 = sbr.rel (%p303) target = $region56
      $region55: #{basic_block_3d_pa_pallas.1} parent=51 // pred_region
        %s306 = smul.u32 8, %s16
        %p307 = scmp.lt.s32.totalorder %s306, 15
        %s308 = scalar_select %p307, %s306, 15
        %s309 = smul.addr %s308, 8
        %s310 = scalar_lea.vmem %s0, %s309
        %s311 = smul.u32 8, %s16
      $region56: #{basic_block_3d_pa_pallas.1} parent=51 // pred_fallthru
        _
    $region52: #{basic_block_3d_pa_pallas.1} parent=5 // pred_fallthru
      _
    %p312 = scmp.le.s32.totalorder 1, %s16
    %p313 = scmp.lt.s32.totalorder %s16, 3
    %p314 = pnand %p312, %p313
    %p315 = pneg %p314
    // Predicated region
    $region57: #{basic_block_3d_pa_pallas.1} parent=5 // pred_check
      _
    $region58: #{basic_block_3d_pa_pallas.1} parent=5 // pred_check_branch
      %317 = sbr.rel (%p314) target = $region60
    $region59: #{basic_block_3d_pa_pallas.1} parent=5 // pred_region
      %s318 = ssub.s32 %s16, 1
      %s319 = smul.u32 8, %s21
      %p320 = scmp.lt.s32.totalorder %s319, 15
      %s321 = scalar_select %p320, %s319, 15
      %s322 = smul.addr %s321, 8
      %s323 = scalar_lea.vmem %s0, %s322
      %p324 = pneg %p42
      %p325 = pneg %p39
      %p326 = pneg %p63
      %p327 = pneg %p60
      %p328 = pneg %p84
      %p329 = pneg %p81
      %p330 = pneg %p105
      %p331 = pneg %p102
      %p332 = pneg %p126
      %p333 = pneg %p123
      %p334 = pneg %p147
      %p335 = pneg %p144
      %p336 = pneg %p168
      %p337 = pneg %p165
      %p338 = pneg %p189
      %p339 = pneg %p186
      %p340 = pneg %p210
      %p341 = pneg %p207
      %p342 = pneg %p231
      %p343 = pneg %p228
      %p344 = pneg %p257
      %p345 = pneg %p254
      %s346 = smul.u32 8, %s21
      %p347 = scmp.lt.s32.totalorder %s346, 15
      %s348 = scalar_select %p347, %s346, 15
      %s349 = smul.addr %s348, 8
      %s350 = scalar_lea.vmem %s10, %s349
      %s351 = smul.u32 8, %s21
      %p352 = scmp.lt.s32.totalorder %s351, 15
      %s353 = scalar_select %p352, %s351, 15
      %s354 = smul.addr %s353, 8
      %s355 = scalar_lea.vmem %s0, %s354
      %s356 = smul.u32 8, %s21
      %s357 = smul.u32 8, %s21
      %p358 = scmp.lt.s32.totalorder %s357, 15
      %s359 = scalar_select %p358, %s357, 15
      %s360 = smul.addr %s359, 8
      %s361 = scalar_lea.vmem %s10, %s360
      %s362 = smul.u32 8, %s21
      %v363 = vld [vmem:[%s355] sm:$0xff]
      %v364 = vld [vmem:[%s355 + $0x8] sm:$0xff]
      %v365 = vld [vmem:[%s355 + $0x10] sm:$0xff]
      %v366 = vld [vmem:[%s355 + $0x18] sm:$0xff]
      %v367 = vld [vmem:[%s355 + $0x20] sm:$0xff]
      %v368 = vld [vmem:[%s355 + $0x28] sm:$0xff]
      %v369 = vld [vmem:[%s355 + $0x30] sm:$0xff]
      %v370 = vld [vmem:[%s355 + $0x38] sm:$0xff]
      %v371 = vld [vmem:[%s1] sm:$0xff]
      %v372 = vld [vmem:[%s1 + $0x8] sm:$0xff]
      %v373 = vld [vmem:[%s1 + $0x10] sm:$0xff]
      %v374 = vld [vmem:[%s1 + $0x18] sm:$0xff]
      %v375 = vld [vmem:[%s1 + $0x20] sm:$0xff]
      %v376 = vld [vmem:[%s1 + $0x28] sm:$0xff]
      %v377 = vld [vmem:[%s1 + $0x30] sm:$0xff]
      %v378 = vld [vmem:[%s1 + $0x38] sm:$0xff]
      %s379 = scalar_lea.vmem %s1, 64
      %v380 = vld [vmem:[%s379] sm:$0xff]
      %v381 = vld [vmem:[%s379 + $0x8] sm:$0xff]
      %v382 = vld [vmem:[%s379 + $0x10] sm:$0xff]
      %v383 = vld [vmem:[%s379 + $0x18] sm:$0xff]
      %v384 = vld [vmem:[%s379 + $0x20] sm:$0xff]
      %v385 = vld [vmem:[%s379 + $0x28] sm:$0xff]
      %v386 = vld [vmem:[%s379 + $0x30] sm:$0xff]
      %v387 = vld [vmem:[%s379 + $0x38] sm:$0xff]
      %v388 = vld [vmem:[%s5] sm:$0x1]
      %v390 = vlaneseq
      %v391 = vshrl.u32 %v390, 7
      %v392 = vsub.s32 0, %v391
      %v393 = vrot.slane %v388, %v392
      %v395 = vmul.f32 %v363, %v393
      %v396 = vmul.f32 %v364, %v393
      %v397 = vmul.f32 %v365, %v393
      %v398 = vmul.f32 %v366, %v393
      %v399 = vmul.f32 %v367, %v393
      %v400 = vmul.f32 %v368, %v393
      %v401 = vmul.f32 %v369, %v393
      %v402 = vmul.f32 %v370, %v393
      %v403 = vld [vmem:[%s6] sm:$0x1]
      %v405 = vlaneseq
      %v406 = vshrl.u32 %v405, 7
      %v407 = vsub.s32 0, %v406
      %v408 = vrot.slane %v403, %v407
      %v410 = vadd.f32 %v395, %v408
      %v411 = vadd.f32 %v396, %v408
      %v412 = vadd.f32 %v397, %v408
      %v413 = vadd.f32 %v398, %v408
      %v414 = vadd.f32 %v399, %v408
      %v415 = vadd.f32 %v400, %v408
      %v416 = vadd.f32 %v401, %v408
      %v417 = vadd.f32 %v402, %v408
      %vm418 = vcmp.gt.f32.partialorder %v410, 0.0
      %vm419 = vcmp.gt.f32.partialorder %v411, 0.0
      %vm420 = vcmp.gt.f32.partialorder %v412, 0.0
      %vm421 = vcmp.gt.f32.partialorder %v413, 0.0
      %vm422 = vcmp.gt.f32.partialorder %v414, 0.0
      %vm423 = vcmp.gt.f32.partialorder %v415, 0.0
      %vm424 = vcmp.gt.f32.partialorder %v416, 0.0
      %vm425 = vcmp.gt.f32.partialorder %v417, 0.0
      %v426 = vmin.f32 %v410, 0.0
      %v427 = vmin.f32 %v411, 0.0
      %v428 = vmin.f32 %v412, 0.0
      %v429 = vmin.f32 %v413, 0.0
      %v430 = vmin.f32 %v414, 0.0
      %v431 = vmin.f32 %v415, 0.0
      %v432 = vmin.f32 %v416, 0.0
      %v433 = vmin.f32 %v417, 0.0
      %v434 = vmul.f32 %v426, 1.442695
      %v435 = vpow.pop %v434
      %v436 = vmul.f32 %v427, 1.442695
      %v437 = vpow.pop %v436
      %v438 = vmul.f32 %v428, 1.442695
      %v439 = vpow.pop %v438
      %v440 = vmul.f32 %v429, 1.442695
      %v441 = vpow.pop %v440
      %v442 = vmul.f32 %v430, 1.442695
      %v443 = vpow.pop %v442
      %v444 = vmul.f32 %v431, 1.442695
      %v445 = vpow.pop %v444
      %v446 = vmul.f32 %v432, 1.442695
      %v447 = vpow.pop %v446
      %v448 = vmul.f32 %v433, 1.442695
      %v449 = vpow.pop %v448
      %v450 = vsub.f32 %v435, 1.0
      %v451 = vsub.f32 %v437, 1.0
      %v452 = vsub.f32 %v439, 1.0
      %v453 = vsub.f32 %v441, 1.0
      %v454 = vsub.f32 %v443, 1.0
      %v455 = vsub.f32 %v445, 1.0
      %v456 = vsub.f32 %v447, 1.0
      %v457 = vsub.f32 %v449, 1.0
      %v458 = vsel %vm418, %v410, %v450
      %v459 = vsel %vm419, %v411, %v451
      %v460 = vsel %vm420, %v412, %v452
      %v461 = vsel %vm421, %v413, %v453
      %v462 = vsel %vm422, %v414, %v454
      %v463 = vsel %vm423, %v415, %v455
      %v464 = vsel %vm424, %v416, %v456
      %v465 = vsel %vm425, %v417, %v457
      %s466 = scalar_lea.vmem %s2, 64
      %v467 = vld [vmem:[%s466] sm:$0xff]
      %v468 = vld [vmem:[%s466 + $0x8] sm:$0xff]
      %v469 = vld [vmem:[%s466 + $0x10] sm:$0xff]
      %v470 = vld [vmem:[%s466 + $0x18] sm:$0xff]
      %v471 = vld [vmem:[%s466 + $0x20] sm:$0xff]
      %v472 = vld [vmem:[%s466 + $0x28] sm:$0xff]
      %v473 = vld [vmem:[%s466 + $0x30] sm:$0xff]
      %v474 = vld [vmem:[%s466 + $0x38] sm:$0xff]
      %vm475 = vcmask 523264
      %v477 = vsel %vm475, %v371, 0
      %v480 = vsel %vm475, %v372, 0
      %v483 = vsel %vm475, %v373, 0
      %v486 = vsel %vm475, %v374, 0
      %v489 = vsel %vm475, %v375, 0
      %v492 = vsel %vm475, %v376, 0
      %v495 = vsel %vm475, %v377, 0
      %v498 = vsel %vm475, %v378, 0
      %500 = vmatprep.subr.mxu0 0.0
      %501 = vmatpush1.msra.mxu0 0.0
      %502 = vmatprep.subr.mxu0 0.0
      %503 = vmatpush1.msra.mxu0 0.0
      %504 = vmatprep.subr.mxu0 0.0
      %505 = vmatpush1.msra.mxu0 0.0
      %506 = vmatprep.subr.mxu0 0.0
      %507 = vmatpush1.msra.mxu0 0.0
      %508 = vmatprep.subr.mxu0 0.0
      %509 = vmatpush1.msra.mxu0 0.0
      %510 = vmatprep.subr.mxu0 0.0
      %511 = vmatpush1.msra.mxu0 0.0
      %512 = vmatprep.subr.mxu0 0.0
      %513 = vmatpush1.msra.mxu0 0.0
      %514 = vmatprep.subr.mxu0 0.0
      %515 = vmatpush1.msra.mxu0 0.0
      %516 = vmatprep.subr.mxu0 0.0
      %517 = vmatpush1.msra.mxu0 %v465
      %518 = vmatprep.subr.mxu0 0.0
      %519 = vmatpush1.msra.mxu0 %v464
      %520 = vmatprep.subr.mxu0 0.0
      %521 = vmatpush1.msra.mxu0 %v463
      %522 = vmatprep.subr.mxu0 0.0
      %523 = vmatpush1.msra.mxu0 %v462
      %524 = vmatprep.subr.mxu0 0.0
      %525 = vmatpush1.msra.mxu0 %v461
      %526 = vmatprep.subr.mxu0 0.0
      %527 = vmatpush1.msra.mxu0 %v460
      %528 = vmatprep.subr.mxu0 0.0
      %529 = vmatpush1.msra.mxu0 %v459
      %530 = vmatprep.subr.mxu0 0.0
      %531 = vmatpush1.msra.mxu0 %v458
      %532 = vmatprep.subr.mxu0 0.0
      %533 = vmatpush2.msra.mxu0 0.0
      %534 = vmatprep.subr.mxu0 0.0
      %535 = vmatpush2.msra.mxu0 0.0
      %536 = vmatprep.subr.mxu0 0.0
      %537 = vmatpush2.msra.mxu0 0.0
      %538 = vmatprep.subr.mxu0 0.0
      %539 = vmatpush2.msra.mxu0 0.0
      %540 = vmatprep.subr.mxu0 0.0
      %541 = vmatpush2.msra.mxu0 0.0
      %542 = vmatprep.subr.mxu0 0.0
      %543 = vmatpush2.msra.mxu0 0.0
      %544 = vmatprep.subr.mxu0 0.0
      %545 = vmatpush2.msra.mxu0 0.0
      %546 = vmatprep.subr.mxu0 0.0
      %547 = vmatpush2.msra.mxu0 0.0
      %548 = vmatprep.subr.mxu0 0.0
      %549 = vmatpush2.msra.mxu0 0.0
      %550 = vmatprep.subr.mxu0 0.0
      %551 = vmatpush2.msra.mxu0 0.0
      %552 = vmatprep.subr.mxu0 0.0
      %553 = vmatpush2.msra.mxu0 0.0
      %554 = vmatprep.subr.mxu0 0.0
      %555 = vmatpush2.msra.mxu0 0.0
      %556 = vmatprep.subr.mxu0 0.0
      %557 = vmatpush2.msra.mxu0 0.0
      %558 = vmatprep.subr.mxu0 0.0
      %559 = vmatpush2.msra.mxu0 0.0
      %560 = vmatprep.subr.mxu0 0.0
      %561 = vmatpush2.msra.mxu0 0.0
      %562 = vmatprep.subr.mxu0 0.0
      %563 = vmatpush2.msra.mxu0 0.0
      %564 = vmatprep.mubr.f32.mxu0 0.0
      %565 = vmatmul.mubr.f32.gmra.mxu0 %v477
      %v566 = vpop.f32.mrf.mxu0
      %v567 = vadd.f32 0.0, %v566
      %v568 = vpop.f32.mrf.mxu0
      %569 = vmatprep.mubr.f32.mxu0 0.0
      %570 = vmatmul.mubr.f32.gmra.mxu0 %v480
      %v571 = vpop.f32.mrf.mxu0
      %v572 = vadd.f32 0.0, %v571
      %v573 = vpop.f32.mrf.mxu0
      %574 = vmatprep.mubr.f32.mxu0 0.0
      %575 = vmatmul.mubr.f32.gmra.mxu0 %v483
      %v576 = vpop.f32.mrf.mxu0
      %v577 = vadd.f32 0.0, %v576
      %v578 = vpop.f32.mrf.mxu0
      %579 = vmatprep.mubr.f32.mxu0 0.0
      %580 = vmatmul.mubr.f32.gmra.mxu0 %v486
      %v581 = vpop.f32.mrf.mxu0
      %v582 = vadd.f32 0.0, %v581
      %v583 = vpop.f32.mrf.mxu0
      %584 = vmatprep.mubr.f32.mxu0 0.0
      %585 = vmatmul.mubr.f32.gmra.mxu0 %v489
      %v586 = vpop.f32.mrf.mxu0
      %v587 = vadd.f32 0.0, %v586
      %v588 = vpop.f32.mrf.mxu0
      %589 = vmatprep.mubr.f32.mxu0 0.0
      %590 = vmatmul.mubr.f32.gmra.mxu0 %v492
      %v591 = vpop.f32.mrf.mxu0
      %v592 = vadd.f32 0.0, %v591
      %v593 = vpop.f32.mrf.mxu0
      %594 = vmatprep.mubr.f32.mxu0 0.0
      %595 = vmatmul.mubr.f32.gmra.mxu0 %v495
      %v596 = vpop.f32.mrf.mxu0
      %v597 = vadd.f32 0.0, %v596
      %v598 = vpop.f32.mrf.mxu0
      %599 = vmatprep.mubr.f32.mxu0 0.0
      %600 = vmatmul.mubr.f32.gmra.mxu0 %v498
      %v601 = vpop.f32.mrf.mxu0
      %v602 = vadd.f32 0.0, %v601
      %v603 = vpop.f32.mrf.mxu0
      %604 = vdwg.mxu0
      %v605 = vld [vmem:[%s2] sm:$0xff]
      %v606 = vld [vmem:[%s2 + $0x8] sm:$0xff]
      %v607 = vld [vmem:[%s2 + $0x10] sm:$0xff]
      %v608 = vld [vmem:[%s2 + $0x18] sm:$0xff]
      %v609 = vld [vmem:[%s2 + $0x20] sm:$0xff]
      %v610 = vld [vmem:[%s2 + $0x28] sm:$0xff]
      %v611 = vld [vmem:[%s2 + $0x30] sm:$0xff]
      %v612 = vld [vmem:[%s2 + $0x38] sm:$0xff]
      %v614 = vsel %vm475, %v567, 0
      %v617 = vsel %vm475, %v572, 0
      %v620 = vsel %vm475, %v577, 0
      %v623 = vsel %vm475, %v582, 0
      %v626 = vsel %vm475, %v587, 0
      %v629 = vsel %vm475, %v592, 0
      %v632 = vsel %vm475, %v597, 0
      %v635 = vsel %vm475, %v602, 0
      %637 = vmatprep.subr.mxu0 0.0
      %638 = vmatpush1.msra.mxu0 0.0
      %639 = vmatprep.subr.mxu0 0.0
      %640 = vmatpush1.msra.mxu0 0.0
      %641 = vmatprep.subr.mxu0 0.0
      %642 = vmatpush1.msra.mxu0 0.0
      %643 = vmatprep.subr.mxu0 0.0
      %644 = vmatpush1.msra.mxu0 0.0
      %645 = vmatprep.subr.mxu0 0.0
      %646 = vmatpush1.msra.mxu0 0.0
      %647 = vmatprep.subr.mxu0 0.0
      %648 = vmatpush1.msra.mxu0 0.0
      %649 = vmatprep.subr.mxu0 0.0
      %650 = vmatpush1.msra.mxu0 0.0
      %651 = vmatprep.subr.mxu0 0.0
      %652 = vmatpush1.msra.mxu0 0.0
      %653 = vmatprep.subr.mxu0 0.0
      %654 = vmatpush1.msra.mxu0 %v612
      %655 = vmatprep.subr.mxu0 0.0
      %656 = vmatpush1.msra.mxu0 %v611
      %657 = vmatprep.subr.mxu0 0.0
      %658 = vmatpush1.msra.mxu0 %v610
      %659 = vmatprep.subr.mxu0 0.0
      %660 = vmatpush1.msra.mxu0 %v609
      %661 = vmatprep.subr.mxu0 0.0
      %662 = vmatpush1.msra.mxu0 %v608
      %663 = vmatprep.subr.mxu0 0.0
      %664 = vmatpush1.msra.mxu0 %v607
      %665 = vmatprep.subr.mxu0 0.0
      %666 = vmatpush1.msra.mxu0 %v606
      %667 = vmatprep.subr.mxu0 0.0
      %668 = vmatpush1.msra.mxu0 %v605
      %669 = vmatprep.subr.mxu0 0.0
      %670 = vmatpush2.msra.mxu0 0.0
      %671 = vmatprep.subr.mxu0 0.0
      %672 = vmatpush2.msra.mxu0 0.0
      %673 = vmatprep.subr.mxu0 0.0
      %674 = vmatpush2.msra.mxu0 0.0
      %675 = vmatprep.subr.mxu0 0.0
      %676 = vmatpush2.msra.mxu0 0.0
      %677 = vmatprep.subr.mxu0 0.0
      %678 = vmatpush2.msra.mxu0 0.0
      %679 = vmatprep.subr.mxu0 0.0
      %680 = vmatpush2.msra.mxu0 0.0
      %681 = vmatprep.subr.mxu0 0.0
      %682 = vmatpush2.msra.mxu0 0.0
      %683 = vmatprep.subr.mxu0 0.0
      %684 = vmatpush2.msra.mxu0 0.0
      %685 = vmatprep.subr.mxu0 0.0
      %686 = vmatpush2.msra.mxu0 0.0
      %687 = vmatprep.subr.mxu0 0.0
      %688 = vmatpush2.msra.mxu0 0.0
      %689 = vmatprep.subr.mxu0 0.0
      %690 = vmatpush2.msra.mxu0 0.0
      %691 = vmatprep.subr.mxu0 0.0
      %692 = vmatpush2.msra.mxu0 0.0
      %693 = vmatprep.subr.mxu0 0.0
      %694 = vmatpush2.msra.mxu0 0.0
      %695 = vmatprep.subr.mxu0 0.0
      %696 = vmatpush2.msra.mxu0 0.0
      %697 = vmatprep.subr.mxu0 0.0
      %698 = vmatpush2.msra.mxu0 0.0
      %699 = vmatprep.subr.mxu0 0.0
      %700 = vmatpush2.msra.mxu0 0.0
      %701 = vmatprep.mubr.f32.mxu0 0.0
      %702 = vmatmul.mubr.f32.gmra.mxu0 %v614
      %v703 = vpop.f32.mrf.mxu0
      %v704 = vadd.f32 0.0, %v703
      %v705 = vpop.f32.mrf.mxu0
      %706 = vmatprep.mubr.f32.mxu0 0.0
      %707 = vmatmul.mubr.f32.gmra.mxu0 %v617
      %v708 = vpop.f32.mrf.mxu0
      %v709 = vadd.f32 0.0, %v708
      %v710 = vpop.f32.mrf.mxu0
      %711 = vmatprep.mubr.f32.mxu0 0.0
      %712 = vmatmul.mubr.f32.gmra.mxu0 %v620
      %v713 = vpop.f32.mrf.mxu0
      %v714 = vadd.f32 0.0, %v713
      %v715 = vpop.f32.mrf.mxu0
      %716 = vmatprep.mubr.f32.mxu0 0.0
      %717 = vmatmul.mubr.f32.gmra.mxu0 %v623
      %v718 = vpop.f32.mrf.mxu0
      %v719 = vadd.f32 0.0, %v718
      %v720 = vpop.f32.mrf.mxu0
      %721 = vmatprep.mubr.f32.mxu0 0.0
      %722 = vmatmul.mubr.f32.gmra.mxu0 %v626
      %v723 = vpop.f32.mrf.mxu0
      %v724 = vadd.f32 0.0, %v723
      %v725 = vpop.f32.mrf.mxu0
      %726 = vmatprep.mubr.f32.mxu0 0.0
      %727 = vmatmul.mubr.f32.gmra.mxu0 %v629
      %v728 = vpop.f32.mrf.mxu0
      %v729 = vadd.f32 0.0, %v728
      %v730 = vpop.f32.mrf.mxu0
      %731 = vmatprep.mubr.f32.mxu0 0.0
      %732 = vmatmul.mubr.f32.gmra.mxu0 %v632
      %v733 = vpop.f32.mrf.mxu0
      %v734 = vadd.f32 0.0, %v733
      %v735 = vpop.f32.mrf.mxu0
      %736 = vmatprep.mubr.f32.mxu0 0.0
      %737 = vmatmul.mubr.f32.gmra.mxu0 %v635
      %v738 = vpop.f32.mrf.mxu0
      %v739 = vadd.f32 0.0, %v738
      %v740 = vpop.f32.mrf.mxu0
      %741 = vdwg.mxu0
      %v743 = vsel %vm475, %v458, 0
      %v746 = vsel %vm475, %v459, 0
      %v749 = vsel %vm475, %v460, 0
      %v752 = vsel %vm475, %v461, 0
      %v755 = vsel %vm475, %v462, 0
      %v758 = vsel %vm475, %v463, 0
      %v761 = vsel %vm475, %v464, 0
      %v764 = vsel %vm475, %v465, 0
      %766 = vmatprep.subr.mxu0 0.0
      %767 = vmatpush1.msra.mxu0 0.0
      %768 = vmatprep.subr.mxu0 0.0
      %769 = vmatpush1.msra.mxu0 0.0
      %770 = vmatprep.subr.mxu0 0.0
      %771 = vmatpush1.msra.mxu0 0.0
      %772 = vmatprep.subr.mxu0 0.0
      %773 = vmatpush1.msra.mxu0 0.0
      %774 = vmatprep.subr.mxu0 0.0
      %775 = vmatpush1.msra.mxu0 0.0
      %776 = vmatprep.subr.mxu0 0.0
      %777 = vmatpush1.msra.mxu0 0.0
      %778 = vmatprep.subr.mxu0 0.0
      %779 = vmatpush1.msra.mxu0 0.0
      %780 = vmatprep.subr.mxu0 0.0
      %781 = vmatpush1.msra.mxu0 0.0
      %782 = vmatprep.subr.mxu0 0.0
      %783 = vmatpush1.msra.mxu0 %v474
      %784 = vmatprep.subr.mxu0 0.0
      %785 = vmatpush1.msra.mxu0 %v473
      %786 = vmatprep.subr.mxu0 0.0
      %787 = vmatpush1.msra.mxu0 %v472
      %788 = vmatprep.subr.mxu0 0.0
      %789 = vmatpush1.msra.mxu0 %v471
      %790 = vmatprep.subr.mxu0 0.0
      %791 = vmatpush1.msra.mxu0 %v470
      %792 = vmatprep.subr.mxu0 0.0
      %793 = vmatpush1.msra.mxu0 %v469
      %794 = vmatprep.subr.mxu0 0.0
      %795 = vmatpush1.msra.mxu0 %v468
      %796 = vmatprep.subr.mxu0 0.0
      %797 = vmatpush1.msra.mxu0 %v467
      %798 = vmatprep.subr.mxu0 0.0
      %799 = vmatpush2.msra.mxu0 0.0
      %800 = vmatprep.subr.mxu0 0.0
      %801 = vmatpush2.msra.mxu0 0.0
      %802 = vmatprep.subr.mxu0 0.0
      %803 = vmatpush2.msra.mxu0 0.0
      %804 = vmatprep.subr.mxu0 0.0
      %805 = vmatpush2.msra.mxu0 0.0
      %806 = vmatprep.subr.mxu0 0.0
      %807 = vmatpush2.msra.mxu0 0.0
      %808 = vmatprep.subr.mxu0 0.0
      %809 = vmatpush2.msra.mxu0 0.0
      %810 = vmatprep.subr.mxu0 0.0
      %811 = vmatpush2.msra.mxu0 0.0
      %812 = vmatprep.subr.mxu0 0.0
      %813 = vmatpush2.msra.mxu0 0.0
      %814 = vmatprep.subr.mxu0 0.0
      %815 = vmatpush2.msra.mxu0 0.0
      %816 = vmatprep.subr.mxu0 0.0
      %817 = vmatpush2.msra.mxu0 0.0
      %818 = vmatprep.subr.mxu0 0.0
      %819 = vmatpush2.msra.mxu0 0.0
      %820 = vmatprep.subr.mxu0 0.0
      %821 = vmatpush2.msra.mxu0 0.0
      %822 = vmatprep.subr.mxu0 0.0
      %823 = vmatpush2.msra.mxu0 0.0
      %824 = vmatprep.subr.mxu0 0.0
      %825 = vmatpush2.msra.mxu0 0.0
      %826 = vmatprep.subr.mxu0 0.0
      %827 = vmatpush2.msra.mxu0 0.0
      %828 = vmatprep.subr.mxu0 0.0
      %829 = vmatpush2.msra.mxu0 0.0
      %830 = vmatprep.mubr.f32.mxu0 0.0
      %831 = vmatmul.mubr.f32.gmra.mxu0 %v743
      %v832 = vpop.f32.mrf.mxu0
      %v833 = vadd.f32 %v704, %v832
      %v834 = vpop.f32.mrf.mxu0
      %835 = vmatprep.mubr.f32.mxu0 0.0
      %836 = vmatmul.mubr.f32.gmra.mxu0 %v746
      %v837 = vpop.f32.mrf.mxu0
      %v838 = vadd.f32 %v709, %v837
      %v839 = vpop.f32.mrf.mxu0
      %840 = vmatprep.mubr.f32.mxu0 0.0
      %841 = vmatmul.mubr.f32.gmra.mxu0 %v749
      %v842 = vpop.f32.mrf.mxu0
      %v843 = vadd.f32 %v714, %v842
      %v844 = vpop.f32.mrf.mxu0
      %845 = vmatprep.mubr.f32.mxu0 0.0
      %846 = vmatmul.mubr.f32.gmra.mxu0 %v752
      %v847 = vpop.f32.mrf.mxu0
      %v848 = vadd.f32 %v719, %v847
      %v849 = vpop.f32.mrf.mxu0
      %850 = vmatprep.mubr.f32.mxu0 0.0
      %851 = vmatmul.mubr.f32.gmra.mxu0 %v755
      %v852 = vpop.f32.mrf.mxu0
      %v853 = vadd.f32 %v724, %v852
      %v854 = vpop.f32.mrf.mxu0
      %855 = vmatprep.mubr.f32.mxu0 0.0
      %856 = vmatmul.mubr.f32.gmra.mxu0 %v758
      %v857 = vpop.f32.mrf.mxu0
      %v858 = vadd.f32 %v729, %v857
      %v859 = vpop.f32.mrf.mxu0
      %860 = vmatprep.mubr.f32.mxu0 0.0
      %861 = vmatmul.mubr.f32.gmra.mxu0 %v761
      %v862 = vpop.f32.mrf.mxu0
      %v863 = vadd.f32 %v734, %v862
      %v864 = vpop.f32.mrf.mxu0
      %865 = vmatprep.mubr.f32.mxu0 0.0
      %866 = vmatmul.mubr.f32.gmra.mxu0 %v764
      %v867 = vpop.f32.mrf.mxu0
      %v868 = vadd.f32 %v739, %v867
      %v869 = vpop.f32.mrf.mxu0
      %870 = vdwg.mxu0
      %v872 = vsel %vm475, %v380, 0
      %v875 = vsel %vm475, %v381, 0
      %v878 = vsel %vm475, %v382, 0
      %v881 = vsel %vm475, %v383, 0
      %v884 = vsel %vm475, %v384, 0
      %v887 = vsel %vm475, %v385, 0
      %v890 = vsel %vm475, %v386, 0
      %v893 = vsel %vm475, %v387, 0
      %895 = vmatprep.subr.mxu0 0.0
      %896 = vmatpush1.msra.mxu0 0.0
      %897 = vmatprep.subr.mxu0 0.0
      %898 = vmatpush1.msra.mxu0 0.0
      %899 = vmatprep.subr.mxu0 0.0
      %900 = vmatpush1.msra.mxu0 0.0
      %901 = vmatprep.subr.mxu0 0.0
      %902 = vmatpush1.msra.mxu0 0.0
      %903 = vmatprep.subr.mxu0 0.0
      %904 = vmatpush1.msra.mxu0 0.0
      %905 = vmatprep.subr.mxu0 0.0
      %906 = vmatpush1.msra.mxu0 0.0
      %907 = vmatprep.subr.mxu0 0.0
      %908 = vmatpush1.msra.mxu0 0.0
      %909 = vmatprep.subr.mxu0 0.0
      %910 = vmatpush1.msra.mxu0 0.0
      %911 = vmatprep.subr.mxu0 0.0
      %912 = vmatpush1.msra.mxu0 %v465
      %913 = vmatprep.subr.mxu0 0.0
      %914 = vmatpush1.msra.mxu0 %v464
      %915 = vmatprep.subr.mxu0 0.0
      %916 = vmatpush1.msra.mxu0 %v463
      %917 = vmatprep.subr.mxu0 0.0
      %918 = vmatpush1.msra.mxu0 %v462
      %919 = vmatprep.subr.mxu0 0.0
      %920 = vmatpush1.msra.mxu0 %v461
      %921 = vmatprep.subr.mxu0 0.0
      %922 = vmatpush1.msra.mxu0 %v460
      %923 = vmatprep.subr.mxu0 0.0
      %924 = vmatpush1.msra.mxu0 %v459
      %925 = vmatprep.subr.mxu0 0.0
      %926 = vmatpush1.msra.mxu0 %v458
      %927 = vmatprep.subr.mxu0 0.0
      %928 = vmatpush2.msra.mxu0 0.0
      %929 = vmatprep.subr.mxu0 0.0
      %930 = vmatpush2.msra.mxu0 0.0
      %931 = vmatprep.subr.mxu0 0.0
      %932 = vmatpush2.msra.mxu0 0.0
      %933 = vmatprep.subr.mxu0 0.0
      %934 = vmatpush2.msra.mxu0 0.0
      %935 = vmatprep.subr.mxu0 0.0
      %936 = vmatpush2.msra.mxu0 0.0
      %937 = vmatprep.subr.mxu0 0.0
      %938 = vmatpush2.msra.mxu0 0.0
      %939 = vmatprep.subr.mxu0 0.0
      %940 = vmatpush2.msra.mxu0 0.0
      %941 = vmatprep.subr.mxu0 0.0
      %942 = vmatpush2.msra.mxu0 0.0
      %943 = vmatprep.subr.mxu0 0.0
      %944 = vmatpush2.msra.mxu0 0.0
      %945 = vmatprep.subr.mxu0 0.0
      %946 = vmatpush2.msra.mxu0 0.0
      %947 = vmatprep.subr.mxu0 0.0
      %948 = vmatpush2.msra.mxu0 0.0
      %949 = vmatprep.subr.mxu0 0.0
      %950 = vmatpush2.msra.mxu0 0.0
      %951 = vmatprep.subr.mxu0 0.0
      %952 = vmatpush2.msra.mxu0 0.0
      %953 = vmatprep.subr.mxu0 0.0
      %954 = vmatpush2.msra.mxu0 0.0
      %955 = vmatprep.subr.mxu0 0.0
      %956 = vmatpush2.msra.mxu0 0.0
      %957 = vmatprep.subr.mxu0 0.0
      %958 = vmatpush2.msra.mxu0 0.0
      %959 = vmatprep.mubr.f32.mxu0 0.0
      %960 = vmatmul.mubr.f32.gmra.mxu0 %v872
      %v961 = vpop.f32.mrf.mxu0
      %v962 = vadd.f32 0.0, %v961
      %v963 = vpop.f32.mrf.mxu0
      %964 = vmatprep.mubr.f32.mxu0 0.0
      %965 = vmatmul.mubr.f32.gmra.mxu0 %v875
      %v966 = vpop.f32.mrf.mxu0
      %v967 = vadd.f32 0.0, %v966
      %v968 = vpop.f32.mrf.mxu0
      %969 = vmatprep.mubr.f32.mxu0 0.0
      %970 = vmatmul.mubr.f32.gmra.mxu0 %v878
      %v971 = vpop.f32.mrf.mxu0
      %v972 = vadd.f32 0.0, %v971
      %v973 = vpop.f32.mrf.mxu0
      %974 = vmatprep.mubr.f32.mxu0 0.0
      %975 = vmatmul.mubr.f32.gmra.mxu0 %v881
      %v976 = vpop.f32.mrf.mxu0
      %v977 = vadd.f32 0.0, %v976
      %v978 = vpop.f32.mrf.mxu0
      %979 = vmatprep.mubr.f32.mxu0 0.0
      %980 = vmatmul.mubr.f32.gmra.mxu0 %v884
      %v981 = vpop.f32.mrf.mxu0
      %v982 = vadd.f32 0.0, %v981
      %v983 = vpop.f32.mrf.mxu0
      %984 = vmatprep.mubr.f32.mxu0 0.0
      %985 = vmatmul.mubr.f32.gmra.mxu0 %v887
      %v986 = vpop.f32.mrf.mxu0
      %v987 = vadd.f32 0.0, %v986
      %v988 = vpop.f32.mrf.mxu0
      %989 = vmatprep.mubr.f32.mxu0 0.0
      %990 = vmatmul.mubr.f32.gmra.mxu0 %v890
      %v991 = vpop.f32.mrf.mxu0
      %v992 = vadd.f32 0.0, %v991
      %v993 = vpop.f32.mrf.mxu0
      %994 = vmatprep.mubr.f32.mxu0 0.0
      %995 = vmatmul.mubr.f32.gmra.mxu0 %v893
      %v996 = vpop.f32.mrf.mxu0
      %v997 = vadd.f32 0.0, %v996
      %v998 = vpop.f32.mrf.mxu0
      %999 = vdwg.mxu0
      %s1000 = scalar_lea.vmem %s2, 128
      %v1001 = vld [vmem:[%s1000] sm:$0xff]
      %v1002 = vld [vmem:[%s1000 + $0x8] sm:$0xff]
      %v1003 = vld [vmem:[%s1000 + $0x10] sm:$0xff]
      %v1004 = vld [vmem:[%s1000 + $0x18] sm:$0xff]
      %v1005 = vld [vmem:[%s1000 + $0x20] sm:$0xff]
      %v1006 = vld [vmem:[%s1000 + $0x28] sm:$0xff]
      %v1007 = vld [vmem:[%s1000 + $0x30] sm:$0xff]
      %v1008 = vld [vmem:[%s1000 + $0x38] sm:$0xff]
      %v1010 = vsel %vm475, %v962, 0
      %v1013 = vsel %vm475, %v967, 0
      %v1016 = vsel %vm475, %v972, 0
      %v1019 = vsel %vm475, %v977, 0
      %v1022 = vsel %vm475, %v982, 0
      %v1025 = vsel %vm475, %v987, 0
      %v1028 = vsel %vm475, %v992, 0
      %v1031 = vsel %vm475, %v997, 0
      %1033 = vmatprep.subr.mxu0 0.0
      %1034 = vmatpush1.msra.mxu0 0.0
      %1035 = vmatprep.subr.mxu0 0.0
      %1036 = vmatpush1.msra.mxu0 0.0
      %1037 = vmatprep.subr.mxu0 0.0
      %1038 = vmatpush1.msra.mxu0 0.0
      %1039 = vmatprep.subr.mxu0 0.0
      %1040 = vmatpush1.msra.mxu0 0.0
      %1041 = vmatprep.subr.mxu0 0.0
      %1042 = vmatpush1.msra.mxu0 0.0
      %1043 = vmatprep.subr.mxu0 0.0
      %1044 = vmatpush1.msra.mxu0 0.0
      %1045 = vmatprep.subr.mxu0 0.0
      %1046 = vmatpush1.msra.mxu0 0.0
      %1047 = vmatprep.subr.mxu0 0.0
      %1048 = vmatpush1.msra.mxu0 0.0
      %1049 = vmatprep.subr.mxu0 0.0
      %1050 = vmatpush1.msra.mxu0 %v1008
      %1051 = vmatprep.subr.mxu0 0.0
      %1052 = vmatpush1.msra.mxu0 %v1007
      %1053 = vmatprep.subr.mxu0 0.0
      %1054 = vmatpush1.msra.mxu0 %v1006
      %1055 = vmatprep.subr.mxu0 0.0
      %1056 = vmatpush1.msra.mxu0 %v1005
      %1057 = vmatprep.subr.mxu0 0.0
      %1058 = vmatpush1.msra.mxu0 %v1004
      %1059 = vmatprep.subr.mxu0 0.0
      %1060 = vmatpush1.msra.mxu0 %v1003
      %1061 = vmatprep.subr.mxu0 0.0
      %1062 = vmatpush1.msra.mxu0 %v1002
      %1063 = vmatprep.subr.mxu0 0.0
      %1064 = vmatpush1.msra.mxu0 %v1001
      %1065 = vmatprep.subr.mxu0 0.0
      %1066 = vmatpush2.msra.mxu0 0.0
      %1067 = vmatprep.subr.mxu0 0.0
      %1068 = vmatpush2.msra.mxu0 0.0
      %1069 = vmatprep.subr.mxu0 0.0
      %1070 = vmatpush2.msra.mxu0 0.0
      %1071 = vmatprep.subr.mxu0 0.0
      %1072 = vmatpush2.msra.mxu0 0.0
      %1073 = vmatprep.subr.mxu0 0.0
      %1074 = vmatpush2.msra.mxu0 0.0
      %1075 = vmatprep.subr.mxu0 0.0
      %1076 = vmatpush2.msra.mxu0 0.0
      %1077 = vmatprep.subr.mxu0 0.0
      %1078 = vmatpush2.msra.mxu0 0.0
      %1079 = vmatprep.subr.mxu0 0.0
      %1080 = vmatpush2.msra.mxu0 0.0
      %1081 = vmatprep.subr.mxu0 0.0
      %1082 = vmatpush2.msra.mxu0 0.0
      %1083 = vmatprep.subr.mxu0 0.0
      %1084 = vmatpush2.msra.mxu0 0.0
      %1085 = vmatprep.subr.mxu0 0.0
      %1086 = vmatpush2.msra.mxu0 0.0
      %1087 = vmatprep.subr.mxu0 0.0
      %1088 = vmatpush2.msra.mxu0 0.0
      %1089 = vmatprep.subr.mxu0 0.0
      %1090 = vmatpush2.msra.mxu0 0.0
      %1091 = vmatprep.subr.mxu0 0.0
      %1092 = vmatpush2.msra.mxu0 0.0
      %1093 = vmatprep.subr.mxu0 0.0
      %1094 = vmatpush2.msra.mxu0 0.0
      %1095 = vmatprep.subr.mxu0 0.0
      %1096 = vmatpush2.msra.mxu0 0.0
      %1097 = vmatprep.mubr.f32.mxu0 0.0
      %1098 = vmatmul.mubr.f32.gmra.mxu0 %v1010
      %v1099 = vpop.f32.mrf.mxu0
      %v1100 = vadd.f32 0.0, %v1099
      %v1101 = vpop.f32.mrf.mxu0
      %1102 = vmatprep.mubr.f32.mxu0 0.0
      %1103 = vmatmul.mubr.f32.gmra.mxu0 %v1013
      %v1104 = vpop.f32.mrf.mxu0
      %v1105 = vadd.f32 0.0, %v1104
      %v1106 = vpop.f32.mrf.mxu0
      %1107 = vmatprep.mubr.f32.mxu0 0.0
      %1108 = vmatmul.mubr.f32.gmra.mxu0 %v1016
      %v1109 = vpop.f32.mrf.mxu0
      %v1110 = vadd.f32 0.0, %v1109
      %v1111 = vpop.f32.mrf.mxu0
      %1112 = vmatprep.mubr.f32.mxu0 0.0
      %1113 = vmatmul.mubr.f32.gmra.mxu0 %v1019
      %v1114 = vpop.f32.mrf.mxu0
      %v1115 = vadd.f32 0.0, %v1114
      %v1116 = vpop.f32.mrf.mxu0
      %1117 = vmatprep.mubr.f32.mxu0 0.0
      %1118 = vmatmul.mubr.f32.gmra.mxu0 %v1022
      %v1119 = vpop.f32.mrf.mxu0
      %v1120 = vadd.f32 0.0, %v1119
      %v1121 = vpop.f32.mrf.mxu0
      %1122 = vmatprep.mubr.f32.mxu0 0.0
      %1123 = vmatmul.mubr.f32.gmra.mxu0 %v1025
      %v1124 = vpop.f32.mrf.mxu0
      %v1125 = vadd.f32 0.0, %v1124
      %v1126 = vpop.f32.mrf.mxu0
      %1127 = vmatprep.mubr.f32.mxu0 0.0
      %1128 = vmatmul.mubr.f32.gmra.mxu0 %v1028
      %v1129 = vpop.f32.mrf.mxu0
      %v1130 = vadd.f32 0.0, %v1129
      %v1131 = vpop.f32.mrf.mxu0
      %1132 = vmatprep.mubr.f32.mxu0 0.0
      %1133 = vmatmul.mubr.f32.gmra.mxu0 %v1031
      %v1134 = vpop.f32.mrf.mxu0
      %v1135 = vadd.f32 0.0, %v1134
      %v1136 = vpop.f32.mrf.mxu0
      %1137 = vdwg.mxu0
      %v1138 = vadd.f32 %v833, %v1100
      %v1139 = vadd.f32 %v838, %v1105
      %v1140 = vadd.f32 %v843, %v1110
      %v1141 = vadd.f32 %v848, %v1115
      %v1142 = vadd.f32 %v853, %v1120
      %v1143 = vadd.f32 %v858, %v1125
      %v1144 = vadd.f32 %v863, %v1130
      %v1145 = vadd.f32 %v868, %v1135
      %v1146 = vld [vmem:[%s7] sm:$0x1]
      %v1148 = vlaneseq
      %v1149 = vshrl.u32 %v1148, 7
      %v1150 = vsub.s32 0, %v1149
      %v1151 = vrot.slane %v1146, %v1150
      %v1153 = vmul.f32 %v1138, %v1151
      %v1154 = vmul.f32 %v1139, %v1151
      %v1155 = vmul.f32 %v1140, %v1151
      %v1156 = vmul.f32 %v1141, %v1151
      %v1157 = vmul.f32 %v1142, %v1151
      %v1158 = vmul.f32 %v1143, %v1151
      %v1159 = vmul.f32 %v1144, %v1151
      %v1160 = vmul.f32 %v1145, %v1151
      %v1161 = vld [vmem:[%s8] sm:$0x1]
      %v1163 = vlaneseq
      %v1164 = vshrl.u32 %v1163, 7
      %v1165 = vsub.s32 0, %v1164
      %v1166 = vrot.slane %v1161, %v1165
      %v1168 = vadd.f32 %v1153, %v1166
      %v1169 = vadd.f32 %v1154, %v1166
      %v1170 = vadd.f32 %v1155, %v1166
      %v1171 = vadd.f32 %v1156, %v1166
      %v1172 = vadd.f32 %v1157, %v1166
      %v1173 = vadd.f32 %v1158, %v1166
      %v1174 = vadd.f32 %v1159, %v1166
      %v1175 = vadd.f32 %v1160, %v1166
      %vm1176 = vcmp.gt.f32.partialorder %v1168, 0.0
      %vm1177 = vcmp.gt.f32.partialorder %v1169, 0.0
      %vm1178 = vcmp.gt.f32.partialorder %v1170, 0.0
      %vm1179 = vcmp.gt.f32.partialorder %v1171, 0.0
      %vm1180 = vcmp.gt.f32.partialorder %v1172, 0.0
      %vm1181 = vcmp.gt.f32.partialorder %v1173, 0.0
      %vm1182 = vcmp.gt.f32.partialorder %v1174, 0.0
      %vm1183 = vcmp.gt.f32.partialorder %v1175, 0.0
      %v1184 = vmin.f32 %v1168, 0.0
      %v1185 = vmin.f32 %v1169, 0.0
      %v1186 = vmin.f32 %v1170, 0.0
      %v1187 = vmin.f32 %v1171, 0.0
      %v1188 = vmin.f32 %v1172, 0.0
      %v1189 = vmin.f32 %v1173, 0.0
      %v1190 = vmin.f32 %v1174, 0.0
      %v1191 = vmin.f32 %v1175, 0.0
      %v1192 = vmul.f32 %v1184, 1.442695
      %v1193 = vpow.pop %v1192
      %v1194 = vmul.f32 %v1185, 1.442695
      %v1195 = vpow.pop %v1194
      %v1196 = vmul.f32 %v1186, 1.442695
      %v1197 = vpow.pop %v1196
      %v1198 = vmul.f32 %v1187, 1.442695
      %v1199 = vpow.pop %v1198
      %v1200 = vmul.f32 %v1188, 1.442695
      %v1201 = vpow.pop %v1200
      %v1202 = vmul.f32 %v1189, 1.442695
      %v1203 = vpow.pop %v1202
      %v1204 = vmul.f32 %v1190, 1.442695
      %v1205 = vpow.pop %v1204
      %v1206 = vmul.f32 %v1191, 1.442695
      %v1207 = vpow.pop %v1206
      %v1208 = vsub.f32 %v1193, 1.0
      %v1209 = vsub.f32 %v1195, 1.0
      %v1210 = vsub.f32 %v1197, 1.0
      %v1211 = vsub.f32 %v1199, 1.0
      %v1212 = vsub.f32 %v1201, 1.0
      %v1213 = vsub.f32 %v1203, 1.0
      %v1214 = vsub.f32 %v1205, 1.0
      %v1215 = vsub.f32 %v1207, 1.0
      %v1216 = vsel %vm1176, %v1168, %v1208
      %v1217 = vsel %vm1177, %v1169, %v1209
      %v1218 = vsel %vm1178, %v1170, %v1210
      %v1219 = vsel %vm1179, %v1171, %v1211
      %v1220 = vsel %vm1180, %v1172, %v1212
      %v1221 = vsel %vm1181, %v1173, %v1213
      %v1222 = vsel %vm1182, %v1174, %v1214
      %v1223 = vsel %vm1183, %v1175, %v1215
      %s1224 = scalar_lea.vmem %s3, 128
      %v1225 = vld [vmem:[%s1224] sm:$0xff]
      %v1226 = vld [vmem:[%s1224 + $0x8] sm:$0xff]
      %v1227 = vld [vmem:[%s1224 + $0x10] sm:$0xff]
      %v1228 = vld [vmem:[%s1224 + $0x18] sm:$0xff]
      %v1229 = vld [vmem:[%s1224 + $0x20] sm:$0xff]
      %v1230 = vld [vmem:[%s1224 + $0x28] sm:$0xff]
      %v1231 = vld [vmem:[%s1224 + $0x30] sm:$0xff]
      %v1232 = vld [vmem:[%s1224 + $0x38] sm:$0xff]
      %v1233 = vld [vmem:[%s1224 + $0x40] sm:$0xff]
      %v1234 = vld [vmem:[%s1224 + $0x48] sm:$0xff]
      %v1235 = vld [vmem:[%s1224 + $0x50] sm:$0xff]
      %v1236 = vld [vmem:[%s1224 + $0x58] sm:$0xff]
      %v1237 = vld [vmem:[%s1224 + $0x60] sm:$0xff]
      %v1238 = vld [vmem:[%s1224 + $0x68] sm:$0xff]
      %v1239 = vld [vmem:[%s1224 + $0x70] sm:$0xff]
      %v1240 = vld [vmem:[%s1224 + $0x78] sm:$0xff]
      %1241 = vmatprep.subr.mxu0 0.0
      %1242 = vmatpush1.msra.mxu0 0.0
      %1243 = vmatprep.subr.mxu0 0.0
      %1244 = vmatpush1.msra.mxu0 0.0
      %1245 = vmatprep.subr.mxu0 0.0
      %1246 = vmatpush1.msra.mxu0 0.0
      %1247 = vmatprep.subr.mxu0 0.0
      %1248 = vmatpush1.msra.mxu0 0.0
      %1249 = vmatprep.subr.mxu0 0.0
      %1250 = vmatpush1.msra.mxu0 0.0
      %1251 = vmatprep.subr.mxu0 0.0
      %1252 = vmatpush1.msra.mxu0 0.0
      %1253 = vmatprep.subr.mxu0 0.0
      %1254 = vmatpush1.msra.mxu0 0.0
      %1255 = vmatprep.subr.mxu0 0.0
      %1256 = vmatpush1.msra.mxu0 0.0
      %1257 = vmatprep.subr.mxu0 0.0
      %1258 = vmatpush1.msra.mxu0 %v1223
      %1259 = vmatprep.subr.mxu0 0.0
      %1260 = vmatpush1.msra.mxu0 %v1222
      %1261 = vmatprep.subr.mxu0 0.0
      %1262 = vmatpush1.msra.mxu0 %v1221
      %1263 = vmatprep.subr.mxu0 0.0
      %1264 = vmatpush1.msra.mxu0 %v1220
      %1265 = vmatprep.subr.mxu0 0.0
      %1266 = vmatpush1.msra.mxu0 %v1219
      %1267 = vmatprep.subr.mxu0 0.0
      %1268 = vmatpush1.msra.mxu0 %v1218
      %1269 = vmatprep.subr.mxu0 0.0
      %1270 = vmatpush1.msra.mxu0 %v1217
      %1271 = vmatprep.subr.mxu0 0.0
      %1272 = vmatpush1.msra.mxu0 %v1216
      %1273 = vmatprep.subr.mxu0 0.0
      %1274 = vmatpush2.msra.mxu0 0.0
      %1275 = vmatprep.subr.mxu0 0.0
      %1276 = vmatpush2.msra.mxu0 0.0
      %1277 = vmatprep.subr.mxu0 0.0
      %1278 = vmatpush2.msra.mxu0 0.0
      %1279 = vmatprep.subr.mxu0 0.0
      %1280 = vmatpush2.msra.mxu0 0.0
      %1281 = vmatprep.subr.mxu0 0.0
      %1282 = vmatpush2.msra.mxu0 0.0
      %1283 = vmatprep.subr.mxu0 0.0
      %1284 = vmatpush2.msra.mxu0 0.0
      %1285 = vmatprep.subr.mxu0 0.0
      %1286 = vmatpush2.msra.mxu0 0.0
      %1287 = vmatprep.subr.mxu0 0.0
      %1288 = vmatpush2.msra.mxu0 0.0
      %1289 = vmatprep.subr.mxu0 0.0
      %1290 = vmatpush2.msra.mxu0 0.0
      %1291 = vmatprep.subr.mxu0 0.0
      %1292 = vmatpush2.msra.mxu0 0.0
      %1293 = vmatprep.subr.mxu0 0.0
      %1294 = vmatpush2.msra.mxu0 0.0
      %1295 = vmatprep.subr.mxu0 0.0
      %1296 = vmatpush2.msra.mxu0 0.0
      %1297 = vmatprep.subr.mxu0 0.0
      %1298 = vmatpush2.msra.mxu0 0.0
      %1299 = vmatprep.subr.mxu0 0.0
      %1300 = vmatpush2.msra.mxu0 0.0
      %1301 = vmatprep.subr.mxu0 0.0
      %1302 = vmatpush2.msra.mxu0 0.0
      %1303 = vmatprep.subr.mxu0 0.0
      %1304 = vmatpush2.msra.mxu0 0.0
      %1305 = vmatprep.mubr.f32.mxu0 0.0
      %1306 = vmatmul.mubr.f32.gmra.mxu0 %v477
      %v1307 = vpop.f32.mrf.mxu0
      %v1308 = vadd.f32 0.0, %v1307
      %v1309 = vpop.f32.mrf.mxu0
      %1310 = vmatprep.mubr.f32.mxu0 0.0
      %1311 = vmatmul.mubr.f32.gmra.mxu0 %v480
      %v1312 = vpop.f32.mrf.mxu0
      %v1313 = vadd.f32 0.0, %v1312
      %v1314 = vpop.f32.mrf.mxu0
      %1315 = vmatprep.mubr.f32.mxu0 0.0
      %1316 = vmatmul.mubr.f32.gmra.mxu0 %v483
      %v1317 = vpop.f32.mrf.mxu0
      %v1318 = vadd.f32 0.0, %v1317
      %v1319 = vpop.f32.mrf.mxu0
      %1320 = vmatprep.mubr.f32.mxu0 0.0
      %1321 = vmatmul.mubr.f32.gmra.mxu0 %v486
      %v1322 = vpop.f32.mrf.mxu0
      %v1323 = vadd.f32 0.0, %v1322
      %v1324 = vpop.f32.mrf.mxu0
      %1325 = vmatprep.mubr.f32.mxu0 0.0
      %1326 = vmatmul.mubr.f32.gmra.mxu0 %v489
      %v1327 = vpop.f32.mrf.mxu0
      %v1328 = vadd.f32 0.0, %v1327
      %v1329 = vpop.f32.mrf.mxu0
      %1330 = vmatprep.mubr.f32.mxu0 0.0
      %1331 = vmatmul.mubr.f32.gmra.mxu0 %v492
      %v1332 = vpop.f32.mrf.mxu0
      %v1333 = vadd.f32 0.0, %v1332
      %v1334 = vpop.f32.mrf.mxu0
      %1335 = vmatprep.mubr.f32.mxu0 0.0
      %1336 = vmatmul.mubr.f32.gmra.mxu0 %v495
      %v1337 = vpop.f32.mrf.mxu0
      %v1338 = vadd.f32 0.0, %v1337
      %v1339 = vpop.f32.mrf.mxu0
      %1340 = vmatprep.mubr.f32.mxu0 0.0
      %1341 = vmatmul.mubr.f32.gmra.mxu0 %v498
      %v1342 = vpop.f32.mrf.mxu0
      %v1343 = vadd.f32 0.0, %v1342
      %v1344 = vpop.f32.mrf.mxu0
      %1345 = vdwg.mxu0
      %v1346 = vld [vmem:[%s3] sm:$0xff]
      %v1347 = vld [vmem:[%s3 + $0x8] sm:$0xff]
      %v1348 = vld [vmem:[%s3 + $0x10] sm:$0xff]
      %v1349 = vld [vmem:[%s3 + $0x18] sm:$0xff]
      %v1350 = vld [vmem:[%s3 + $0x20] sm:$0xff]
      %v1351 = vld [vmem:[%s3 + $0x28] sm:$0xff]
      %v1352 = vld [vmem:[%s3 + $0x30] sm:$0xff]
      %v1353 = vld [vmem:[%s3 + $0x38] sm:$0xff]
      %v1354 = vld [vmem:[%s3 + $0x40] sm:$0xff]
      %v1355 = vld [vmem:[%s3 + $0x48] sm:$0xff]
      %v1356 = vld [vmem:[%s3 + $0x50] sm:$0xff]
      %v1357 = vld [vmem:[%s3 + $0x58] sm:$0xff]
      %v1358 = vld [vmem:[%s3 + $0x60] sm:$0xff]
      %v1359 = vld [vmem:[%s3 + $0x68] sm:$0xff]
      %v1360 = vld [vmem:[%s3 + $0x70] sm:$0xff]
      %v1361 = vld [vmem:[%s3 + $0x78] sm:$0xff]
      %1362 = vmatprep.subr.mxu0 0.0
      %1363 = vmatpush1.msra.mxu0 %v1361
      %1364 = vmatprep.subr.mxu0 0.0
      %1365 = vmatpush1.msra.mxu0 %v1360
      %1366 = vmatprep.subr.mxu0 0.0
      %1367 = vmatpush1.msra.mxu0 %v1359
      %1368 = vmatprep.subr.mxu0 0.0
      %1369 = vmatpush1.msra.mxu0 %v1358
      %1370 = vmatprep.subr.mxu0 0.0
      %1371 = vmatpush1.msra.mxu0 %v1357
      %1372 = vmatprep.subr.mxu0 0.0
      %1373 = vmatpush1.msra.mxu0 %v1356
      %1374 = vmatprep.subr.mxu0 0.0
      %1375 = vmatpush1.msra.mxu0 %v1355
      %1376 = vmatprep.subr.mxu0 0.0
      %1377 = vmatpush1.msra.mxu0 %v1354
      %1378 = vmatprep.subr.mxu0 0.0
      %1379 = vmatpush1.msra.mxu0 %v1353
      %1380 = vmatprep.subr.mxu0 0.0
      %1381 = vmatpush1.msra.mxu0 %v1352
      %1382 = vmatprep.subr.mxu0 0.0
      %1383 = vmatpush1.msra.mxu0 %v1351
      %1384 = vmatprep.subr.mxu0 0.0
      %1385 = vmatpush1.msra.mxu0 %v1350
      %1386 = vmatprep.subr.mxu0 0.0
      %1387 = vmatpush1.msra.mxu0 %v1349
      %1388 = vmatprep.subr.mxu0 0.0
      %1389 = vmatpush1.msra.mxu0 %v1348
      %1390 = vmatprep.subr.mxu0 0.0
      %1391 = vmatpush1.msra.mxu0 %v1347
      %1392 = vmatprep.subr.mxu0 0.0
      %1393 = vmatpush1.msra.mxu0 %v1346
      %1394 = vmatprep.subr.mxu0 0.0
      %1395 = vmatpush2.msra.mxu0 0.0
      %1396 = vmatprep.subr.mxu0 0.0
      %1397 = vmatpush2.msra.mxu0 0.0
      %1398 = vmatprep.subr.mxu0 0.0
      %1399 = vmatpush2.msra.mxu0 0.0
      %1400 = vmatprep.subr.mxu0 0.0
      %1401 = vmatpush2.msra.mxu0 0.0
      %1402 = vmatprep.subr.mxu0 0.0
      %1403 = vmatpush2.msra.mxu0 0.0
      %1404 = vmatprep.subr.mxu0 0.0
      %1405 = vmatpush2.msra.mxu0 0.0
      %1406 = vmatprep.subr.mxu0 0.0
      %1407 = vmatpush2.msra.mxu0 0.0
      %1408 = vmatprep.subr.mxu0 0.0
      %1409 = vmatpush2.msra.mxu0 0.0
      %1410 = vmatprep.subr.mxu0 0.0
      %1411 = vmatpush2.msra.mxu0 0.0
      %1412 = vmatprep.subr.mxu0 0.0
      %1413 = vmatpush2.msra.mxu0 0.0
      %1414 = vmatprep.subr.mxu0 0.0
      %1415 = vmatpush2.msra.mxu0 0.0
      %1416 = vmatprep.subr.mxu0 0.0
      %1417 = vmatpush2.msra.mxu0 0.0
      %1418 = vmatprep.subr.mxu0 0.0
      %1419 = vmatpush2.msra.mxu0 0.0
      %1420 = vmatprep.subr.mxu0 0.0
      %1421 = vmatpush2.msra.mxu0 0.0
      %1422 = vmatprep.subr.mxu0 0.0
      %1423 = vmatpush2.msra.mxu0 0.0
      %1424 = vmatprep.subr.mxu0 0.0
      %1425 = vmatpush2.msra.mxu0 0.0
      %1426 = vmatprep.mubr.f32.mxu0 0.0
      %1427 = vmatmul.mubr.f32.gmra.mxu0 %v1308
      %v1428 = vpop.f32.mrf.mxu0
      %v1429 = vadd.f32 0.0, %v1428
      %v1430 = vpop.f32.mrf.mxu0
      %1431 = vmatprep.mubr.f32.mxu0 0.0
      %1432 = vmatmul.mubr.f32.gmra.mxu0 %v1313
      %v1433 = vpop.f32.mrf.mxu0
      %v1434 = vadd.f32 0.0, %v1433
      %v1435 = vpop.f32.mrf.mxu0
      %1436 = vmatprep.mubr.f32.mxu0 0.0
      %1437 = vmatmul.mubr.f32.gmra.mxu0 %v1318
      %v1438 = vpop.f32.mrf.mxu0
      %v1439 = vadd.f32 0.0, %v1438
      %v1440 = vpop.f32.mrf.mxu0
      %1441 = vmatprep.mubr.f32.mxu0 0.0
      %1442 = vmatmul.mubr.f32.gmra.mxu0 %v1323
      %v1443 = vpop.f32.mrf.mxu0
      %v1444 = vadd.f32 0.0, %v1443
      %v1445 = vpop.f32.mrf.mxu0
      %1446 = vmatprep.mubr.f32.mxu0 0.0
      %1447 = vmatmul.mubr.f32.gmra.mxu0 %v1328
      %v1448 = vpop.f32.mrf.mxu0
      %v1449 = vadd.f32 0.0, %v1448
      %v1450 = vpop.f32.mrf.mxu0
      %1451 = vmatprep.mubr.f32.mxu0 0.0
      %1452 = vmatmul.mubr.f32.gmra.mxu0 %v1333
      %v1453 = vpop.f32.mrf.mxu0
      %v1454 = vadd.f32 0.0, %v1453
      %v1455 = vpop.f32.mrf.mxu0
      %1456 = vmatprep.mubr.f32.mxu0 0.0
      %1457 = vmatmul.mubr.f32.gmra.mxu0 %v1338
      %v1458 = vpop.f32.mrf.mxu0
      %v1459 = vadd.f32 0.0, %v1458
      %v1460 = vpop.f32.mrf.mxu0
      %1461 = vmatprep.mubr.f32.mxu0 0.0
      %1462 = vmatmul.mubr.f32.gmra.mxu0 %v1343
      %v1463 = vpop.f32.mrf.mxu0
      %v1464 = vadd.f32 0.0, %v1463
      %v1465 = vpop.f32.mrf.mxu0
      %1466 = vdwg.mxu0
      %1467 = vmatprep.subr.mxu0 0.0
      %1468 = vmatpush1.msra.mxu0 %v1240
      %1469 = vmatprep.subr.mxu0 0.0
      %1470 = vmatpush1.msra.mxu0 %v1239
      %1471 = vmatprep.subr.mxu0 0.0
      %1472 = vmatpush1.msra.mxu0 %v1238
      %1473 = vmatprep.subr.mxu0 0.0
      %1474 = vmatpush1.msra.mxu0 %v1237
      %1475 = vmatprep.subr.mxu0 0.0
      %1476 = vmatpush1.msra.mxu0 %v1236
      %1477 = vmatprep.subr.mxu0 0.0
      %1478 = vmatpush1.msra.mxu0 %v1235
      %1479 = vmatprep.subr.mxu0 0.0
      %1480 = vmatpush1.msra.mxu0 %v1234
      %1481 = vmatprep.subr.mxu0 0.0
      %1482 = vmatpush1.msra.mxu0 %v1233
      %1483 = vmatprep.subr.mxu0 0.0
      %1484 = vmatpush1.msra.mxu0 %v1232
      %1485 = vmatprep.subr.mxu0 0.0
      %1486 = vmatpush1.msra.mxu0 %v1231
      %1487 = vmatprep.subr.mxu0 0.0
      %1488 = vmatpush1.msra.mxu0 %v1230
      %1489 = vmatprep.subr.mxu0 0.0
      %1490 = vmatpush1.msra.mxu0 %v1229
      %1491 = vmatprep.subr.mxu0 0.0
      %1492 = vmatpush1.msra.mxu0 %v1228
      %1493 = vmatprep.subr.mxu0 0.0
      %1494 = vmatpush1.msra.mxu0 %v1227
      %1495 = vmatprep.subr.mxu0 0.0
      %1496 = vmatpush1.msra.mxu0 %v1226
      %1497 = vmatprep.subr.mxu0 0.0
      %1498 = vmatpush1.msra.mxu0 %v1225
      %1499 = vmatprep.subr.mxu0 0.0
      %1500 = vmatpush2.msra.mxu0 0.0
      %1501 = vmatprep.subr.mxu0 0.0
      %1502 = vmatpush2.msra.mxu0 0.0
      %1503 = vmatprep.subr.mxu0 0.0
      %1504 = vmatpush2.msra.mxu0 0.0
      %1505 = vmatprep.subr.mxu0 0.0
      %1506 = vmatpush2.msra.mxu0 0.0
      %1507 = vmatprep.subr.mxu0 0.0
      %1508 = vmatpush2.msra.mxu0 0.0
      %1509 = vmatprep.subr.mxu0 0.0
      %1510 = vmatpush2.msra.mxu0 0.0
      %1511 = vmatprep.subr.mxu0 0.0
      %1512 = vmatpush2.msra.mxu0 0.0
      %1513 = vmatprep.subr.mxu0 0.0
      %1514 = vmatpush2.msra.mxu0 0.0
      %1515 = vmatprep.subr.mxu0 0.0
      %1516 = vmatpush2.msra.mxu0 0.0
      %1517 = vmatprep.subr.mxu0 0.0
      %1518 = vmatpush2.msra.mxu0 0.0
      %1519 = vmatprep.subr.mxu0 0.0
      %1520 = vmatpush2.msra.mxu0 0.0
      %1521 = vmatprep.subr.mxu0 0.0
      %1522 = vmatpush2.msra.mxu0 0.0
      %1523 = vmatprep.subr.mxu0 0.0
      %1524 = vmatpush2.msra.mxu0 0.0
      %1525 = vmatprep.subr.mxu0 0.0
      %1526 = vmatpush2.msra.mxu0 0.0
      %1527 = vmatprep.subr.mxu0 0.0
      %1528 = vmatpush2.msra.mxu0 0.0
      %1529 = vmatprep.subr.mxu0 0.0
      %1530 = vmatpush2.msra.mxu0 0.0
      %1531 = vmatprep.mubr.f32.mxu0 0.0
      %1532 = vmatmul.mubr.f32.gmra.mxu0 %v1216
      %v1533 = vpop.f32.mrf.mxu0
      %v1534 = vadd.f32 %v1429, %v1533
      %v1535 = vpop.f32.mrf.mxu0
      %1536 = vmatprep.mubr.f32.mxu0 0.0
      %1537 = vmatmul.mubr.f32.gmra.mxu0 %v1217
      %v1538 = vpop.f32.mrf.mxu0
      %v1539 = vadd.f32 %v1434, %v1538
      %v1540 = vpop.f32.mrf.mxu0
      %1541 = vmatprep.mubr.f32.mxu0 0.0
      %1542 = vmatmul.mubr.f32.gmra.mxu0 %v1218
      %v1543 = vpop.f32.mrf.mxu0
      %v1544 = vadd.f32 %v1439, %v1543
      %v1545 = vpop.f32.mrf.mxu0
      %1546 = vmatprep.mubr.f32.mxu0 0.0
      %1547 = vmatmul.mubr.f32.gmra.mxu0 %v1219
      %v1548 = vpop.f32.mrf.mxu0
      %v1549 = vadd.f32 %v1444, %v1548
      %v1550 = vpop.f32.mrf.mxu0
      %1551 = vmatprep.mubr.f32.mxu0 0.0
      %1552 = vmatmul.mubr.f32.gmra.mxu0 %v1220
      %v1553 = vpop.f32.mrf.mxu0
      %v1554 = vadd.f32 %v1449, %v1553
      %v1555 = vpop.f32.mrf.mxu0
      %1556 = vmatprep.mubr.f32.mxu0 0.0
      %1557 = vmatmul.mubr.f32.gmra.mxu0 %v1221
      %v1558 = vpop.f32.mrf.mxu0
      %v1559 = vadd.f32 %v1454, %v1558
      %v1560 = vpop.f32.mrf.mxu0
      %1561 = vmatprep.mubr.f32.mxu0 0.0
      %1562 = vmatmul.mubr.f32.gmra.mxu0 %v1222
      %v1563 = vpop.f32.mrf.mxu0
      %v1564 = vadd.f32 %v1459, %v1563
      %v1565 = vpop.f32.mrf.mxu0
      %1566 = vmatprep.mubr.f32.mxu0 0.0
      %1567 = vmatmul.mubr.f32.gmra.mxu0 %v1223
      %v1568 = vpop.f32.mrf.mxu0
      %v1569 = vadd.f32 %v1464, %v1568
      %v1570 = vpop.f32.mrf.mxu0
      %1571 = vdwg.mxu0
      %1572 = vmatprep.subr.mxu0 0.0
      %1573 = vmatpush1.msra.mxu0 0.0
      %1574 = vmatprep.subr.mxu0 0.0
      %1575 = vmatpush1.msra.mxu0 0.0
      %1576 = vmatprep.subr.mxu0 0.0
      %1577 = vmatpush1.msra.mxu0 0.0
      %1578 = vmatprep.subr.mxu0 0.0
      %1579 = vmatpush1.msra.mxu0 0.0
      %1580 = vmatprep.subr.mxu0 0.0
      %1581 = vmatpush1.msra.mxu0 0.0
      %1582 = vmatprep.subr.mxu0 0.0
      %1583 = vmatpush1.msra.mxu0 0.0
      %1584 = vmatprep.subr.mxu0 0.0
      %1585 = vmatpush1.msra.mxu0 0.0
      %1586 = vmatprep.subr.mxu0 0.0
      %1587 = vmatpush1.msra.mxu0 0.0
      %1588 = vmatprep.subr.mxu0 0.0
      %1589 = vmatpush1.msra.mxu0 %v1223
      %1590 = vmatprep.subr.mxu0 0.0
      %1591 = vmatpush1.msra.mxu0 %v1222
      %1592 = vmatprep.subr.mxu0 0.0
      %1593 = vmatpush1.msra.mxu0 %v1221
      %1594 = vmatprep.subr.mxu0 0.0
      %1595 = vmatpush1.msra.mxu0 %v1220
      %1596 = vmatprep.subr.mxu0 0.0
      %1597 = vmatpush1.msra.mxu0 %v1219
      %1598 = vmatprep.subr.mxu0 0.0
      %1599 = vmatpush1.msra.mxu0 %v1218
      %1600 = vmatprep.subr.mxu0 0.0
      %1601 = vmatpush1.msra.mxu0 %v1217
      %1602 = vmatprep.subr.mxu0 0.0
      %1603 = vmatpush1.msra.mxu0 %v1216
      %1604 = vmatprep.subr.mxu0 0.0
      %1605 = vmatpush2.msra.mxu0 0.0
      %1606 = vmatprep.subr.mxu0 0.0
      %1607 = vmatpush2.msra.mxu0 0.0
      %1608 = vmatprep.subr.mxu0 0.0
      %1609 = vmatpush2.msra.mxu0 0.0
      %1610 = vmatprep.subr.mxu0 0.0
      %1611 = vmatpush2.msra.mxu0 0.0
      %1612 = vmatprep.subr.mxu0 0.0
      %1613 = vmatpush2.msra.mxu0 0.0
      %1614 = vmatprep.subr.mxu0 0.0
      %1615 = vmatpush2.msra.mxu0 0.0
      %1616 = vmatprep.subr.mxu0 0.0
      %1617 = vmatpush2.msra.mxu0 0.0
      %1618 = vmatprep.subr.mxu0 0.0
      %1619 = vmatpush2.msra.mxu0 0.0
      %1620 = vmatprep.subr.mxu0 0.0
      %1621 = vmatpush2.msra.mxu0 0.0
      %1622 = vmatprep.subr.mxu0 0.0
      %1623 = vmatpush2.msra.mxu0 0.0
      %1624 = vmatprep.subr.mxu0 0.0
      %1625 = vmatpush2.msra.mxu0 0.0
      %1626 = vmatprep.subr.mxu0 0.0
      %1627 = vmatpush2.msra.mxu0 0.0
      %1628 = vmatprep.subr.mxu0 0.0
      %1629 = vmatpush2.msra.mxu0 0.0
      %1630 = vmatprep.subr.mxu0 0.0
      %1631 = vmatpush2.msra.mxu0 0.0
      %1632 = vmatprep.subr.mxu0 0.0
      %1633 = vmatpush2.msra.mxu0 0.0
      %1634 = vmatprep.subr.mxu0 0.0
      %1635 = vmatpush2.msra.mxu0 0.0
      %1636 = vmatprep.mubr.f32.mxu0 0.0
      %1637 = vmatmul.mubr.f32.gmra.mxu0 %v872
      %v1638 = vpop.f32.mrf.mxu0
      %v1639 = vadd.f32 0.0, %v1638
      %v1640 = vpop.f32.mrf.mxu0
      %1641 = vmatprep.mubr.f32.mxu0 0.0
      %1642 = vmatmul.mubr.f32.gmra.mxu0 %v875
      %v1643 = vpop.f32.mrf.mxu0
      %v1644 = vadd.f32 0.0, %v1643
      %v1645 = vpop.f32.mrf.mxu0
      %1646 = vmatprep.mubr.f32.mxu0 0.0
      %1647 = vmatmul.mubr.f32.gmra.mxu0 %v878
      %v1648 = vpop.f32.mrf.mxu0
      %v1649 = vadd.f32 0.0, %v1648
      %v1650 = vpop.f32.mrf.mxu0
      %1651 = vmatprep.mubr.f32.mxu0 0.0
      %1652 = vmatmul.mubr.f32.gmra.mxu0 %v881
      %v1653 = vpop.f32.mrf.mxu0
      %v1654 = vadd.f32 0.0, %v1653
      %v1655 = vpop.f32.mrf.mxu0
      %1656 = vmatprep.mubr.f32.mxu0 0.0
      %1657 = vmatmul.mubr.f32.gmra.mxu0 %v884
      %v1658 = vpop.f32.mrf.mxu0
      %v1659 = vadd.f32 0.0, %v1658
      %v1660 = vpop.f32.mrf.mxu0
      %1661 = vmatprep.mubr.f32.mxu0 0.0
      %1662 = vmatmul.mubr.f32.gmra.mxu0 %v887
      %v1663 = vpop.f32.mrf.mxu0
      %v1664 = vadd.f32 0.0, %v1663
      %v1665 = vpop.f32.mrf.mxu0
      %1666 = vmatprep.mubr.f32.mxu0 0.0
      %1667 = vmatmul.mubr.f32.gmra.mxu0 %v890
      %v1668 = vpop.f32.mrf.mxu0
      %v1669 = vadd.f32 0.0, %v1668
      %v1670 = vpop.f32.mrf.mxu0
      %1671 = vmatprep.mubr.f32.mxu0 0.0
      %1672 = vmatmul.mubr.f32.gmra.mxu0 %v893
      %v1673 = vpop.f32.mrf.mxu0
      %v1674 = vadd.f32 0.0, %v1673
      %v1675 = vpop.f32.mrf.mxu0
      %1676 = vdwg.mxu0
      %s1677 = scalar_lea.vmem %s3, 256
      %v1678 = vld [vmem:[%s1677] sm:$0xff]
      %v1679 = vld [vmem:[%s1677 + $0x8] sm:$0xff]
      %v1680 = vld [vmem:[%s1677 + $0x10] sm:$0xff]
      %v1681 = vld [vmem:[%s1677 + $0x18] sm:$0xff]
      %v1682 = vld [vmem:[%s1677 + $0x20] sm:$0xff]
      %v1683 = vld [vmem:[%s1677 + $0x28] sm:$0xff]
      %v1684 = vld [vmem:[%s1677 + $0x30] sm:$0xff]
      %v1685 = vld [vmem:[%s1677 + $0x38] sm:$0xff]
      %v1686 = vld [vmem:[%s1677 + $0x40] sm:$0xff]
      %v1687 = vld [vmem:[%s1677 + $0x48] sm:$0xff]
      %v1688 = vld [vmem:[%s1677 + $0x50] sm:$0xff]
      %v1689 = vld [vmem:[%s1677 + $0x58] sm:$0xff]
      %v1690 = vld [vmem:[%s1677 + $0x60] sm:$0xff]
      %v1691 = vld [vmem:[%s1677 + $0x68] sm:$0xff]
      %v1692 = vld [vmem:[%s1677 + $0x70] sm:$0xff]
      %v1693 = vld [vmem:[%s1677 + $0x78] sm:$0xff]
      %1694 = vmatprep.subr.mxu0 0.0
      %1695 = vmatpush1.msra.mxu0 %v1693
      %1696 = vmatprep.subr.mxu0 0.0
      %1697 = vmatpush1.msra.mxu0 %v1692
      %1698 = vmatprep.subr.mxu0 0.0
      %1699 = vmatpush1.msra.mxu0 %v1691
      %1700 = vmatprep.subr.mxu0 0.0
      %1701 = vmatpush1.msra.mxu0 %v1690
      %1702 = vmatprep.subr.mxu0 0.0
      %1703 = vmatpush1.msra.mxu0 %v1689
      %1704 = vmatprep.subr.mxu0 0.0
      %1705 = vmatpush1.msra.mxu0 %v1688
      %1706 = vmatprep.subr.mxu0 0.0
      %1707 = vmatpush1.msra.mxu0 %v1687
      %1708 = vmatprep.subr.mxu0 0.0
      %1709 = vmatpush1.msra.mxu0 %v1686
      %1710 = vmatprep.subr.mxu0 0.0
      %1711 = vmatpush1.msra.mxu0 %v1685
      %1712 = vmatprep.subr.mxu0 0.0
      %1713 = vmatpush1.msra.mxu0 %v1684
      %1714 = vmatprep.subr.mxu0 0.0
      %1715 = vmatpush1.msra.mxu0 %v1683
      %1716 = vmatprep.subr.mxu0 0.0
      %1717 = vmatpush1.msra.mxu0 %v1682
      %1718 = vmatprep.subr.mxu0 0.0
      %1719 = vmatpush1.msra.mxu0 %v1681
      %1720 = vmatprep.subr.mxu0 0.0
      %1721 = vmatpush1.msra.mxu0 %v1680
      %1722 = vmatprep.subr.mxu0 0.0
      %1723 = vmatpush1.msra.mxu0 %v1679
      %1724 = vmatprep.subr.mxu0 0.0
      %1725 = vmatpush1.msra.mxu0 %v1678
      %1726 = vmatprep.subr.mxu0 0.0
      %1727 = vmatpush2.msra.mxu0 0.0
      %1728 = vmatprep.subr.mxu0 0.0
      %1729 = vmatpush2.msra.mxu0 0.0
      %1730 = vmatprep.subr.mxu0 0.0
      %1731 = vmatpush2.msra.mxu0 0.0
      %1732 = vmatprep.subr.mxu0 0.0
      %1733 = vmatpush2.msra.mxu0 0.0
      %1734 = vmatprep.subr.mxu0 0.0
      %1735 = vmatpush2.msra.mxu0 0.0
      %1736 = vmatprep.subr.mxu0 0.0
      %1737 = vmatpush2.msra.mxu0 0.0
      %1738 = vmatprep.subr.mxu0 0.0
      %1739 = vmatpush2.msra.mxu0 0.0
      %1740 = vmatprep.subr.mxu0 0.0
      %1741 = vmatpush2.msra.mxu0 0.0
      %1742 = vmatprep.subr.mxu0 0.0
      %1743 = vmatpush2.msra.mxu0 0.0
      %1744 = vmatprep.subr.mxu0 0.0
      %1745 = vmatpush2.msra.mxu0 0.0
      %1746 = vmatprep.subr.mxu0 0.0
      %1747 = vmatpush2.msra.mxu0 0.0
      %1748 = vmatprep.subr.mxu0 0.0
      %1749 = vmatpush2.msra.mxu0 0.0
      %1750 = vmatprep.subr.mxu0 0.0
      %1751 = vmatpush2.msra.mxu0 0.0
      %1752 = vmatprep.subr.mxu0 0.0
      %1753 = vmatpush2.msra.mxu0 0.0
      %1754 = vmatprep.subr.mxu0 0.0
      %1755 = vmatpush2.msra.mxu0 0.0
      %1756 = vmatprep.subr.mxu0 0.0
      %1757 = vmatpush2.msra.mxu0 0.0
      %1758 = vmatprep.mubr.f32.mxu0 0.0
      %1759 = vmatmul.mubr.f32.gmra.mxu0 %v1639
      %v1760 = vpop.f32.mrf.mxu0
      %v1761 = vadd.f32 0.0, %v1760
      %v1762 = vpop.f32.mrf.mxu0
      %1763 = vmatprep.mubr.f32.mxu0 0.0
      %1764 = vmatmul.mubr.f32.gmra.mxu0 %v1644
      %v1765 = vpop.f32.mrf.mxu0
      %v1766 = vadd.f32 0.0, %v1765
      %v1767 = vpop.f32.mrf.mxu0
      %1768 = vmatprep.mubr.f32.mxu0 0.0
      %1769 = vmatmul.mubr.f32.gmra.mxu0 %v1649
      %v1770 = vpop.f32.mrf.mxu0
      %v1771 = vadd.f32 0.0, %v1770
      %v1772 = vpop.f32.mrf.mxu0
      %1773 = vmatprep.mubr.f32.mxu0 0.0
      %1774 = vmatmul.mubr.f32.gmra.mxu0 %v1654
      %v1775 = vpop.f32.mrf.mxu0
      %v1776 = vadd.f32 0.0, %v1775
      %v1777 = vpop.f32.mrf.mxu0
      %1778 = vmatprep.mubr.f32.mxu0 0.0
      %1779 = vmatmul.mubr.f32.gmra.mxu0 %v1659
      %v1780 = vpop.f32.mrf.mxu0
      %v1781 = vadd.f32 0.0, %v1780
      %v1782 = vpop.f32.mrf.mxu0
      %1783 = vmatprep.mubr.f32.mxu0 0.0
      %1784 = vmatmul.mubr.f32.gmra.mxu0 %v1664
      %v1785 = vpop.f32.mrf.mxu0
      %v1786 = vadd.f32 0.0, %v1785
      %v1787 = vpop.f32.mrf.mxu0
      %1788 = vmatprep.mubr.f32.mxu0 0.0
      %1789 = vmatmul.mubr.f32.gmra.mxu0 %v1669
      %v1790 = vpop.f32.mrf.mxu0
      %v1791 = vadd.f32 0.0, %v1790
      %v1792 = vpop.f32.mrf.mxu0
      %1793 = vmatprep.mubr.f32.mxu0 0.0
      %1794 = vmatmul.mubr.f32.gmra.mxu0 %v1674
      %v1795 = vpop.f32.mrf.mxu0
      %v1796 = vadd.f32 0.0, %v1795
      %v1797 = vpop.f32.mrf.mxu0
      %1798 = vdwg.mxu0
      %v1799 = vadd.f32 %v1534, %v1761
      %v1800 = vadd.f32 %v1539, %v1766
      %v1801 = vadd.f32 %v1544, %v1771
      %v1802 = vadd.f32 %v1549, %v1776
      %v1803 = vadd.f32 %v1554, %v1781
      %v1804 = vadd.f32 %v1559, %v1786
      %v1805 = vadd.f32 %v1564, %v1791
      %v1806 = vadd.f32 %v1569, %v1796
      %v1807 = vld [vmem:[%s4] sm:$0xff]
      %v1808 = vld [vmem:[%s4 + $0x8] sm:$0xff]
      %v1809 = vld [vmem:[%s4 + $0x10] sm:$0xff]
      %v1810 = vld [vmem:[%s4 + $0x18] sm:$0xff]
      %v1811 = vld [vmem:[%s4 + $0x20] sm:$0xff]
      %v1812 = vld [vmem:[%s4 + $0x28] sm:$0xff]
      %v1813 = vld [vmem:[%s4 + $0x30] sm:$0xff]
      %v1814 = vld [vmem:[%s4 + $0x38] sm:$0xff]
      %v1816 = vsel %vm475, %v363, 0
      %v1819 = vsel %vm475, %v364, 0
      %v1822 = vsel %vm475, %v365, 0
      %v1825 = vsel %vm475, %v366, 0
      %v1828 = vsel %vm475, %v367, 0
      %v1831 = vsel %vm475, %v368, 0
      %v1834 = vsel %vm475, %v369, 0
      %v1837 = vsel %vm475, %v370, 0
      %1839 = vmatprep.subr.mxu0 0.0
      %1840 = vmatpush1.msra.mxu0 0.0
      %1841 = vmatprep.subr.mxu0 0.0
      %1842 = vmatpush1.msra.mxu0 0.0
      %1843 = vmatprep.subr.mxu0 0.0
      %1844 = vmatpush1.msra.mxu0 0.0
      %1845 = vmatprep.subr.mxu0 0.0
      %1846 = vmatpush1.msra.mxu0 0.0
      %1847 = vmatprep.subr.mxu0 0.0
      %1848 = vmatpush1.msra.mxu0 0.0
      %1849 = vmatprep.subr.mxu0 0.0
      %1850 = vmatpush1.msra.mxu0 0.0
      %1851 = vmatprep.subr.mxu0 0.0
      %1852 = vmatpush1.msra.mxu0 0.0
      %1853 = vmatprep.subr.mxu0 0.0
      %1854 = vmatpush1.msra.mxu0 0.0
      %1855 = vmatprep.subr.mxu0 0.0
      %1856 = vmatpush1.msra.mxu0 %v1814
      %1857 = vmatprep.subr.mxu0 0.0
      %1858 = vmatpush1.msra.mxu0 %v1813
      %1859 = vmatprep.subr.mxu0 0.0
      %1860 = vmatpush1.msra.mxu0 %v1812
      %1861 = vmatprep.subr.mxu0 0.0
      %1862 = vmatpush1.msra.mxu0 %v1811
      %1863 = vmatprep.subr.mxu0 0.0
      %1864 = vmatpush1.msra.mxu0 %v1810
      %1865 = vmatprep.subr.mxu0 0.0
      %1866 = vmatpush1.msra.mxu0 %v1809
      %1867 = vmatprep.subr.mxu0 0.0
      %1868 = vmatpush1.msra.mxu0 %v1808
      %1869 = vmatprep.subr.mxu0 0.0
      %1870 = vmatpush1.msra.mxu0 %v1807
      %1871 = vmatprep.subr.mxu0 0.0
      %1872 = vmatpush2.msra.mxu0 0.0
      %1873 = vmatprep.subr.mxu0 0.0
      %1874 = vmatpush2.msra.mxu0 0.0
      %1875 = vmatprep.subr.mxu0 0.0
      %1876 = vmatpush2.msra.mxu0 0.0
      %1877 = vmatprep.subr.mxu0 0.0
      %1878 = vmatpush2.msra.mxu0 0.0
      %1879 = vmatprep.subr.mxu0 0.0
      %1880 = vmatpush2.msra.mxu0 0.0
      %1881 = vmatprep.subr.mxu0 0.0
      %1882 = vmatpush2.msra.mxu0 0.0
      %1883 = vmatprep.subr.mxu0 0.0
      %1884 = vmatpush2.msra.mxu0 0.0
      %1885 = vmatprep.subr.mxu0 0.0
      %1886 = vmatpush2.msra.mxu0 0.0
      %1887 = vmatprep.subr.mxu0 0.0
      %1888 = vmatpush2.msra.mxu0 0.0
      %1889 = vmatprep.subr.mxu0 0.0
      %1890 = vmatpush2.msra.mxu0 0.0
      %1891 = vmatprep.subr.mxu0 0.0
      %1892 = vmatpush2.msra.mxu0 0.0
      %1893 = vmatprep.subr.mxu0 0.0
      %1894 = vmatpush2.msra.mxu0 0.0
      %1895 = vmatprep.subr.mxu0 0.0
      %1896 = vmatpush2.msra.mxu0 0.0
      %1897 = vmatprep.subr.mxu0 0.0
      %1898 = vmatpush2.msra.mxu0 0.0
      %1899 = vmatprep.subr.mxu0 0.0
      %1900 = vmatpush2.msra.mxu0 0.0
      %1901 = vmatprep.subr.mxu0 0.0
      %1902 = vmatpush2.msra.mxu0 0.0
      %1903 = vmatprep.mubr.f32.mxu0 0.0
      %1904 = vmatmul.mubr.f32.gmra.mxu0 %v1816
      %v1905 = vpop.f32.mrf.mxu0
      %v1906 = vadd.f32 0.0, %v1905
      %v1907 = vpop.f32.mrf.mxu0
      %1908 = vmatprep.mubr.f32.mxu0 0.0
      %1909 = vmatmul.mubr.f32.gmra.mxu0 %v1819
      %v1910 = vpop.f32.mrf.mxu0
      %v1911 = vadd.f32 0.0, %v1910
      %v1912 = vpop.f32.mrf.mxu0
      %1913 = vmatprep.mubr.f32.mxu0 0.0
      %1914 = vmatmul.mubr.f32.gmra.mxu0 %v1822
      %v1915 = vpop.f32.mrf.mxu0
      %v1916 = vadd.f32 0.0, %v1915
      %v1917 = vpop.f32.mrf.mxu0
      %1918 = vmatprep.mubr.f32.mxu0 0.0
      %1919 = vmatmul.mubr.f32.gmra.mxu0 %v1825
      %v1920 = vpop.f32.mrf.mxu0
      %v1921 = vadd.f32 0.0, %v1920
      %v1922 = vpop.f32.mrf.mxu0
      %1923 = vmatprep.mubr.f32.mxu0 0.0
      %1924 = vmatmul.mubr.f32.gmra.mxu0 %v1828
      %v1925 = vpop.f32.mrf.mxu0
      %v1926 = vadd.f32 0.0, %v1925
      %v1927 = vpop.f32.mrf.mxu0
      %1928 = vmatprep.mubr.f32.mxu0 0.0
      %1929 = vmatmul.mubr.f32.gmra.mxu0 %v1831
      %v1930 = vpop.f32.mrf.mxu0
      %v1931 = vadd.f32 0.0, %v1930
      %v1932 = vpop.f32.mrf.mxu0
      %1933 = vmatprep.mubr.f32.mxu0 0.0
      %1934 = vmatmul.mubr.f32.gmra.mxu0 %v1834
      %v1935 = vpop.f32.mrf.mxu0
      %v1936 = vadd.f32 0.0, %v1935
      %v1937 = vpop.f32.mrf.mxu0
      %1938 = vmatprep.mubr.f32.mxu0 0.0
      %1939 = vmatmul.mubr.f32.gmra.mxu0 %v1837
      %v1940 = vpop.f32.mrf.mxu0
      %v1941 = vadd.f32 0.0, %v1940
      %v1942 = vpop.f32.mrf.mxu0
      %1943 = vdwg.mxu0
      %v1944 = vadd.f32 %v1799, %v1906
      %v1945 = vadd.f32 %v1800, %v1911
      %v1946 = vadd.f32 %v1801, %v1916
      %v1947 = vadd.f32 %v1802, %v1921
      %v1948 = vadd.f32 %v1803, %v1926
      %v1949 = vadd.f32 %v1804, %v1931
      %v1950 = vadd.f32 %v1805, %v1936
      %v1951 = vadd.f32 %v1806, %v1941
      %v1952 = vld [vmem:[%s9] sm:$0x1]
      %v1954 = vlaneseq
      %v1955 = vshrl.u32 %v1954, 7
      %v1956 = vsub.s32 0, %v1955
      %v1957 = vrot.slane %v1952, %v1956
      %v1959 = vadd.f32 %v1944, %v1957
      %v1960 = vadd.f32 %v1945, %v1957
      %v1961 = vadd.f32 %v1946, %v1957
      %v1962 = vadd.f32 %v1947, %v1957
      %v1963 = vadd.f32 %v1948, %v1957
      %v1964 = vadd.f32 %v1949, %v1957
      %v1965 = vadd.f32 %v1950, %v1957
      %v1966 = vadd.f32 %v1951, %v1957
      %1967 = vst [vmem:[%s361] sm:$0xff] %v1959
      %1968 = vst [vmem:[%s361 + $0x8] sm:$0xff] %v1960
      %1969 = vst [vmem:[%s361 + $0x10] sm:$0xff] %v1961
      %1970 = vst [vmem:[%s361 + $0x18] sm:$0xff] %v1962
      %1971 = vst [vmem:[%s361 + $0x20] sm:$0xff] %v1963
      %1972 = vst [vmem:[%s361 + $0x28] sm:$0xff] %v1964
      %1973 = vst [vmem:[%s361 + $0x30] sm:$0xff] %v1965
      %1974 = vst [vmem:[%s361 + $0x38] sm:$0xff] %v1966
      %s1975 = smul.u32 8, %s21
      %p1976 = scmp.lt.s32.totalorder %s1975, 15
      %s1977 = scalar_select %p1976, %s1975, 15
      %s1978 = smul.addr %s1977, 8
      %s1979 = scalar_lea.vmem %s10, %s1978
      // Predicated region
      $region61: #{basic_block_3d_pa_pallas.1} parent=59 // pred_check
        %p1980 = pneg %p254
      $region62: #{basic_block_3d_pa_pallas.1} parent=59 // pred_check_branch
        %1982 = sbr.rel (%p1980) target = $region64
      $region63: #{basic_block_3d_pa_pallas.1} parent=59 // pred_region
        %s1983 = smul.u32 8, %s21
      $region64: #{basic_block_3d_pa_pallas.1} parent=59 // pred_fallthru
        _
    $region60: #{basic_block_3d_pa_pallas.1} parent=5 // pred_fallthru
      _
    %p1984 = scmp.le.s32.totalorder 2, %s16
    // Predicated region
    $region65: #{basic_block_3d_pa_pallas.1} parent=5 // pred_check
      %p1985 = pneg %p1984
    $region66: #{basic_block_3d_pa_pallas.1} parent=5 // pred_check_branch
      %1987 = sbr.rel (%p1985) target = $region68
    $region67: #{basic_block_3d_pa_pallas.1} parent=5 // pred_region
      %s1988 = ssub.s32 %s16, 2
      // Predicated region
      $region69: #{basic_block_3d_pa_pallas.1} parent=67 // pred_check
        %p1989 = pneg %p260
      $region70: #{basic_block_3d_pa_pallas.1} parent=67 // pred_check_branch
        %1991 = sbr.rel (%p1989) target = $region72
      $region71: #{basic_block_3d_pa_pallas.1} parent=67 // pred_region
        %s1992 = smul.u32 8, %s22
        %p1993 = scmp.lt.s32.totalorder %s1992, 15
        %s1994 = scalar_select %p1993, %s1992, 15
        %s1995 = smul.addr %s1994, 8
        %s1996 = scalar_lea.vmem %s10, %s1995
      $region72: #{basic_block_3d_pa_pallas.1} parent=67 // pred_fallthru
        _
    $region68: #{basic_block_3d_pa_pallas.1} parent=5 // pred_fallthru
      _
  $region6: #{basic_block_3d_pa_pallas.1} parent=0 // loop_footer
    %s20 = sadd.s32 1, %s16
  $region7: #{basic_block_3d_pa_pallas.1} parent=0 // loop_footer_branch
    %15 = sbr.rel target = $region3
  $region8: #{basic_block_3d_pa_pallas.1} parent=0 // loop_exit
    _

</llo_original>
